<compile_context>
chip_gen: v7x
topology: tpu7x:2x2x1
jax: 0.10.0
libtpu: 0.0.40
codegen_flags: <defaults>
</compile_context>

<pallas_src>
import functools

import jax
import jax.numpy as jnp
from jax.experimental import pallas as pl
from jax.experimental.pallas import tpu as pltpu

# ----------------------------- configuration -------------------------------
BATCH = 2
SEQ = 8
INPUT_DIM = 4
HIDDEN_DIM = 32
NUM_LAYERS = 2
OUTPUT_DIM = 4

BATCH_PAD = 8     # pad batch up to a full sublane tile
OUT_PAD = 128     # pad output lane dim to a full vreg lane width


# ------------------------------- kernel ------------------------------------
def lstm_fc_kernel(x_ref, w_ih0_ref, w_blk_ref, b_rest_ref, fc_w_ref, fc_b_ref,
                   out_ref, xw0_ref, *, num_layers, seq_len, batch_pad, hidden):
    """Whole forward pass in one kernel.

    x_ref:      (T*Bp, D_aug)  time-major, batch padded to Bp rows/step, ones column
                               appended (folds layer-0 bias), feature dim zero-padded.
    w_ih0_ref:  (D_aug, 4H)    layer-0 input weights (+ bias row), g-cols pre-scaled x2.
    w_blk_ref:  (L*H, L*4H)    block-bidiagonal recurrent weight [[w_hh0, w_ih1],[0, w_hh1]],
                               g-cols pre-scaled x2.
    b_rest_ref: (1, (L-1)*4H)  biases of layers 1..L-1, g-lanes pre-scaled x2.
    fc_w_ref:   (H, 128)       lane-padded fc weight.
    fc_b_ref:   (1, 128)       lane-padded fc bias.
    out_ref:    (Bp, 128)      lane-dense padded output.
    xw0_ref:    (T*Bp, 4H)     VMEM scratch for the batched layer-0 projection.
    """
    T, Bp, H, L = seq_len, batch_pad, hidden, num_layers
    G = 4 * H

    # Layer-0 input projection (bias folded via the ones column) for ALL time steps in
    # one batched MXU matmul, spilled to VMEM scratch so it does not pin vregs across
    # the unrolled recurrence.
    xw0_ref[...] = jnp.dot(x_ref[...], w_ih0_ref[...],
                           preferred_element_type=jnp.float32)

    w_blk = w_blk_ref[...]                                        # (L*H, L*G)
    b_rest = (jnp.broadcast_to(b_rest_ref[...], (Bp, (L - 1) * G))
              if L > 1 else None)                                 # hoisted broadcast

    def cell(gates, c_prev):
        # g-gate lanes arrive pre-scaled by 2, so tanh(x) = 2*sigmoid(2x) - 1 falls out
        # of a single full-vreg sigmoid (1 EUP push); tanh(c_new) is the 2nd/last push.
        sig = jax.nn.sigmoid(gates)
        i_g = sig[:, 0 * H:1 * H]
        f_g = sig[:, 1 * H:2 * H]
        g_g = 2.0 * sig[:, 2 * H:3 * H] - 1.0
        o_g = sig[:, 3 * H:4 * H]
        c_new = f_g * c_prev + i_g * g_g
        h_new = o_g * jnp.tanh(c_new)
        return h_new, c_new

    h = [jnp.zeros((Bp, H), jnp.float32) for _ in range(L)]
    c = [jnp.zeros((Bp, H), jnp.float32) for _ in range(L)]

    # Wavefront: wave s runs layer l at time t = s - l.  A single fused block matmul per
    # wave, [h_0 | ... | h_{L-1}] @ W_block, is computed from the PRE-wave hidden states,
    # so the per-layer update order inside a wave cannot introduce a time-step skew.
    for s in range(T + L - 1):
        hcat = jnp.concatenate(h, axis=1)                         # (Bp, L*H)
        gates_blk = jnp.dot(hcat, w_blk,
                            preferred_element_type=jnp.float32)   # (Bp, L*G)
        for l in range(L):
            t = s - l
            if 0 <= t < T:
                if l == 0:
                    gates = xw0_ref[t * Bp:(t + 1) * Bp, :] + gates_blk[:, 0:G]
                else:
                    gates = (gates_blk[:, l * G:(l + 1) * G]
                             + b_rest[:, (l - 1) * G:l * G])
                h[l], c[l] = cell(gates, c[l])

    # Final Linear on the last layer's hidden state at the last time step (lane-dense,
    # 128-wide padded output -> unmasked vector stores).
    out = (jnp.dot(h[L - 1], fc_w_ref[...], preferred_element_type=jnp.float32)
           + fc_b_ref[...])
    out_ref[...] = out.astype(out_ref.dtype)


# --------------------- init-time weight preprocessing -----------------------
def prepare_kernel_params(layer_params, fc_w, fc_b, out_pad=OUT_PAD):
    """Constant preprocessing, done ONCE (not in the jitted per-call path)."""
    L = len(layer_params)
    H = layer_params[0][1].shape[0]
    G = 4 * H
    D = layer_params[0][0].shape[0]

    def scale_g(m):  # pre-scale g-gate columns by 2 (tanh(x) = 2*sigmoid(2x) - 1)
        return m.at[..., 2 * H:3 * H].multiply(2.0)

    # Layer-0 input weight with bias row appended (consumed by the ones column of x),
    # feature dim padded to a sublane-aligned row count.
    d_aug = max(8, ((D + 1 + 7) // 8) * 8)
    w_ih0, _, b0 = layer_params[0]
    w_ih0_aug = (jnp.zeros((d_aug, G), jnp.float32)
                 .at[:D, :].set(scale_g(w_ih0))
                 .at[D, :].set(scale_g(b0)[0]))

    # Block-bidiagonal recurrent weight: rows = [h_0 | ... | h_{L-1}], cols = the 4H gate
    # blocks of layers 0..L-1.  One (Bp, L*H) x (L*H, L*4H) MXU matmul per wave.
    w_blk = jnp.zeros((L * H, L * G), jnp.float32)
    for l in range(L):
        w_hh_l = layer_params[l][1]
        w_blk = w_blk.at[l * H:(l + 1) * H, l * G:(l + 1) * G].set(scale_g(w_hh_l))
    for l in range(1, L):
        w_ih_l = layer_params[l][0]   # layer l's input weights consume h_{l-1}
        w_blk = w_blk.at[(l - 1) * H:l * H, l * G:(l + 1) * G].set(scale_g(w_ih_l))

    # Biases of layers 1..L-1 (layer 0's bias is folded into w_ih0_aug).
    if L > 1:
        b_rest = jnp.concatenate(
            [scale_g(layer_params[l][2]) for l in range(1, L)], axis=1)
    else:
        b_rest = jnp.zeros((1, G), jnp.float32)   # dummy, never read in the kernel

    fc_w_pad = jnp.zeros((H, out_pad), jnp.float32).at[:, :fc_w.shape[1]].set(fc_w)
    fc_b_pad = jnp.zeros((1, out_pad), jnp.float32).at[:, :fc_b.shape[1]].set(fc_b)
    return w_ih0_aug, w_blk, b_rest, fc_w_pad, fc_b_pad


# ------------------------------- wrapper ------------------------------------
@functools.partial(jax.jit, static_argnames=("num_layers", "hidden_dim", "output_dim"))
def lstm_forward(x, w_ih0_aug, w_blk, b_rest, fc_w_pad, fc_b_pad,
                 *, num_layers, hidden_dim, output_dim):
    """x: (B, T, D) float32; all weights pre-processed by prepare_kernel_params."""
    B, T, D = x.shape
    Bp = BATCH_PAD
    Op = fc_w_pad.shape[1]
    d_aug = w_ih0_aug.shape[0]

    # Per-call layout plumbing (the only data-dependent prep): pad batch to a full
    # 8-row sublane tile, append the ones column (bias fold), zero-pad the feature dim,
    # go time-major and flatten to (T*Bp, d_aug) so per-step slices are contiguous,
    # sublane-aligned rows inside the kernel.
    x_pad = (jnp.zeros((Bp, T, d_aug), jnp.float32)
             .at[:B, :, :D].set(x)
             .at[:, :, D].set(1.0))
    x_flat = jnp.transpose(x_pad, (1, 0, 2)).reshape(T * Bp, d_aug)

    vmem = pl.BlockSpec(memory_space=pltpu.MemorySpace.VMEM)
    kernel = functools.partial(
        lstm_fc_kernel, num_layers=num_layers, seq_len=T,
        batch_pad=Bp, hidden=hidden_dim)
    out_pad = pl.pallas_call(
        kernel,
        out_shape=jax.ShapeDtypeStruct((Bp, Op), jnp.float32),
        in_specs=[vmem] * 6,
        out_specs=vmem,
        scratch_shapes=[pltpu.VMEM((T * Bp, 4 * hidden_dim), jnp.float32)],
    )(x_flat, w_ih0_aug, w_blk, b_rest, fc_w_pad, fc_b_pad)
    return out_pad[:B, :output_dim]


# ---------------------------- pure-JAX reference ----------------------------
def lstm_forward_ref(x, layer_params, fc_w, fc_b):
    B, T, _ = x.shape
    H = layer_params[0][1].shape[0]
    seq = x
    for (w_ih, w_hh, b) in layer_params:
        h = jnp.zeros((B, H), jnp.float32)
        c = jnp.zeros((B, H), jnp.float32)
        outs = []
        for t in range(T):
            gates = seq[:, t, :] @ w_ih + h @ w_hh + b
            i_g = jax.nn.sigmoid(gates[:, 0 * H:1 * H])
            f_g = jax.nn.sigmoid(gates[:, 1 * H:2 * H])
            g_g = jnp.tanh(gates[:, 2 * H:3 * H])
            o_g = jax.nn.sigmoid(gates[:, 3 * H:4 * H])
            c = f_g * c + i_g * g_g
            h = o_g * jnp.tanh(c)
            outs.append(h)
        seq = jnp.stack(outs, axis=1)
    return seq[:, -1, :] @ fc_w + fc_b


# ---------------------------- parameter init --------------------------------
def init_params(key, input_dim, hidden_dim, num_layers, output_dim):
    """Deterministic uniform(-1/sqrt(H), 1/sqrt(H)) init, like PyTorch defaults."""
    k = 1.0 / jnp.sqrt(jnp.float32(hidden_dim))
    params = []
    for l in range(num_layers):
        d_in = input_dim if l == 0 else hidden_dim
        key, k1, k2, k3, k4 = jax.random.split(key, 5)
        w_ih = jax.random.uniform(k1, (d_in, 4 * hidden_dim), jnp.float32, -k, k)
        w_hh = jax.random.uniform(k2, (hidden_dim, 4 * hidden_dim), jnp.float32, -k, k)
        b_ih = jax.random.uniform(k3, (1, 4 * hidden_dim), jnp.float32, -k, k)
        b_hh = jax.random.uniform(k4, (1, 4 * hidden_dim), jnp.float32, -k, k)
        params.append((w_ih, w_hh, b_ih + b_hh))
    key, k5, k6 = jax.random.split(key, 3)
    fc_w = jax.random.uniform(k5, (hidden_dim, output_dim), jnp.float32, -k, k)
    fc_b = jax.random.uniform(k6, (1, output_dim), jnp.float32, -k, k)
    return tuple(params), fc_w, fc_b, key


# --------------------------------- main --------------------------------------
if __name__ == "__main__":
    key = jax.random.PRNGKey(0)
    layer_params, fc_w, fc_b, key = init_params(
        key, INPUT_DIM, HIDDEN_DIM, NUM_LAYERS, OUTPUT_DIM
    )
    key, kx = jax.random.split(key)
    x = jax.random.normal(kx, (BATCH, SEQ, INPUT_DIM), jnp.float32)

    # Constant weight preprocessing, once, outside the per-call jit path.
    w_ih0_aug, w_blk, b_rest, fc_w_pad, fc_b_pad = prepare_kernel_params(
        layer_params, fc_w, fc_b)

    out = lstm_forward(
        x, w_ih0_aug, w_blk, b_rest, fc_w_pad, fc_b_pad,
        num_layers=NUM_LAYERS, hidden_dim=HIDDEN_DIM, output_dim=OUTPUT_DIM)
    out = jax.block_until_ready(out)

    ref = jax.block_until_ready(lstm_forward_ref(x, layer_params, fc_w, fc_b))
    assert out.shape == (BATCH, OUTPUT_DIM), out.shape
    assert jnp.allclose(out, ref, atol=1e-4, rtol=1e-4), (out, ref)

    print("KERNEL_OK")
</pallas_src>

<mosaic_0001>
module attributes {stable_mosaic.version = 11 : i64} {
  func.func @lstm_fc_kernel(%arg0: memref<64x8xf32, #tpu.memory_space<vmem>>, %arg1: memref<8x128xf32, #tpu.memory_space<vmem>>, %arg2: memref<64x256xf32, #tpu.memory_space<vmem>>, %arg3: memref<1x128xf32, #tpu.memory_space<vmem>>, %arg4: memref<32x128xf32, #tpu.memory_space<vmem>>, %arg5: memref<1x128xf32, #tpu.memory_space<vmem>>, %arg6: memref<8x128xf32, #tpu.memory_space<vmem>>, %arg7: memref<64x128xf32, #tpu.memory_space<vmem>>) attributes {dimension_semantics = [], scalar_prefetch = 0 : i64, scratch_operands = 1 : i64, tpu.core_type = #tpu.core_type<tc>} {
    %c0 = arith.constant 0 : index
    %c0_0 = arith.constant 0 : index
    %0 = vector.load %arg0[%c0, %c0_0] : memref<64x8xf32, #tpu.memory_space<vmem>>, vector<64x8xf32>
    %c0_1 = arith.constant 0 : index
    %c0_2 = arith.constant 0 : index
    %1 = vector.load %arg1[%c0_1, %c0_2] : memref<8x128xf32, #tpu.memory_space<vmem>>, vector<8x128xf32>
    %cst = arith.constant dense<0.000000e+00> : vector<64x128xf32>
    %2 = tpu.matmul %0, %1, %cst {dimension_numbers = #tpu.dot_dimension_numbers<[1], [0], [0], [1], [0, 0, 1, 1], [], []>} : vector<64x8xf32>, vector<8x128xf32>, vector<64x128xf32> -> vector<64x128xf32>
    %c0_3 = arith.constant 0 : index
    %c0_4 = arith.constant 0 : index
    %3 = vector.load %arg7[%c0_3, %c0_4] : memref<64x128xf32, #tpu.memory_space<vmem>>, vector<64x128xf32>
    tpu.vector_store %arg7[%c0_3, %c0_4], %2 {strides = array<i32>} : memref<64x128xf32, #tpu.memory_space<vmem>>, vector<64x128xf32>,
    %c0_5 = arith.constant 0 : index
    %c0_6 = arith.constant 0 : index
    %4 = vector.load %arg2[%c0_5, %c0_6] : memref<64x256xf32, #tpu.memory_space<vmem>>, vector<64x256xf32>
    %c0_7 = arith.constant 0 : index
    %c0_8 = arith.constant 0 : index
    %5 = vector.load %arg3[%c0_7, %c0_8] : memref<1x128xf32, #tpu.memory_space<vmem>>, vector<1x128xf32>
    %6 = vector.shape_cast %5 : vector<1x128xf32> to vector<1x128xf32>
    %7 = vector.broadcast %6 : vector<1x128xf32> to vector<8x128xf32>
    %cst_9 = arith.constant 0.000000e+00 : f32
    %8 = vector.broadcast %cst_9 : f32 to vector<8x32xf32>
    %cst_10 = arith.constant 0.000000e+00 : f32
    %9 = vector.broadcast %cst_10 : f32 to vector<8x32xf32>
    %cst_11 = arith.constant 0.000000e+00 : f32
    %10 = vector.broadcast %cst_11 : f32 to vector<8x32xf32>
    %cst_12 = arith.constant 0.000000e+00 : f32
    %11 = vector.broadcast %cst_12 : f32 to vector<8x32xf32>
    %12 = tpu.concatenate %8, %9 in 1 : vector<8x32xf32>, vector<8x32xf32> -> vector<8x64xf32>
    %cst_13 = arith.constant dense<0.000000e+00> : vector<8x256xf32>
    %13 = tpu.matmul %12, %4, %cst_13 {dimension_numbers = #tpu.dot_dimension_numbers<[1], [0], [0], [1], [0, 0, 1, 1], [], []>} : vector<8x64xf32>, vector<64x256xf32>, vector<8x256xf32> -> vector<8x256xf32>
    %c0_14 = arith.constant 0 : index
    %c0_15 = arith.constant 0 : index
    %14 = vector.load %arg7[%c0_14, %c0_15] : memref<64x128xf32, #tpu.memory_space<vmem>>, vector<8x128xf32>
    %15 = vector.extract_strided_slice %13 {offsets = [0, 0], sizes = [8, 128], strides = [1, 1]} : vector<8x256xf32> to vector<8x128xf32>
    %16 = arith.addf %14, %15 : vector<8x128xf32>
    %17 = arith.negf %16 : vector<8x128xf32>
    %18 = math.exp %17 : vector<8x128xf32>
    %cst_16 = arith.constant 1.000000e+00 : f32
    %19 = vector.broadcast %cst_16 : f32 to vector<8x128xf32>
    %20 = arith.addf %19, %18 : vector<8x128xf32>
    %21 = arith.divf %19, %20 : vector<8x128xf32>
    %22 = vector.extract_strided_slice %21 {offsets = [0, 0], sizes = [8, 32], strides = [1, 1]} : vector<8x128xf32> to vector<8x32xf32>
    %23 = vector.extract_strided_slice %21 {offsets = [0, 32], sizes = [8, 32], strides = [1, 1]} : vector<8x128xf32> to vector<8x32xf32>
    %24 = vector.extract_strided_slice %21 {offsets = [0, 64], sizes = [8, 32], strides = [1, 1]} : vector<8x128xf32> to vector<8x32xf32>
    %cst_17 = arith.constant 2.000000e+00 : f32
    %25 = vector.broadcast %cst_17 : f32 to vector<8x32xf32>
    %26 = arith.mulf %25, %24 : vector<8x32xf32>
    %cst_18 = arith.constant 1.000000e+00 : f32
    %27 = vector.broadcast %cst_18 : f32 to vector<8x32xf32>
    %28 = arith.subf %26, %27 : vector<8x32xf32>
    %29 = vector.extract_strided_slice %21 {offsets = [0, 96], sizes = [8, 32], strides = [1, 1]} : vector<8x128xf32> to vector<8x32xf32>
    %30 = arith.mulf %23, %10 : vector<8x32xf32>
    %31 = arith.mulf %22, %28 : vector<8x32xf32>
    %32 = arith.addf %30, %31 : vector<8x32xf32>
    %33 = math.tanh %32 : vector<8x32xf32>
    %34 = arith.mulf %29, %33 : vector<8x32xf32>
    %35 = tpu.concatenate %34, %9 in 1 : vector<8x32xf32>, vector<8x32xf32> -> vector<8x64xf32>
    %cst_19 = arith.constant dense<0.000000e+00> : vector<8x256xf32>
    %36 = tpu.matmul %35, %4, %cst_19 {dimension_numbers = #tpu.dot_dimension_numbers<[1], [0], [0], [1], [0, 0, 1, 1], [], []>} : vector<8x64xf32>, vector<64x256xf32>, vector<8x256xf32> -> vector<8x256xf32>
    %c8 = arith.constant 8 : index
    %c0_20 = arith.constant 0 : index
    %37 = vector.load %arg7[%c8, %c0_20] : memref<64x128xf32, #tpu.memory_space<vmem>>, vector<8x128xf32>
    %38 = vector.extract_strided_slice %36 {offsets = [0, 0], sizes = [8, 128], strides = [1, 1]} : vector<8x256xf32> to vector<8x128xf32>
    %39 = arith.addf %37, %38 : vector<8x128xf32>
    %40 = arith.negf %39 : vector<8x128xf32>
    %41 = math.exp %40 : vector<8x128xf32>
    %cst_21 = arith.constant 1.000000e+00 : f32
    %42 = vector.broadcast %cst_21 : f32 to vector<8x128xf32>
    %43 = arith.addf %42, %41 : vector<8x128xf32>
    %44 = arith.divf %42, %43 : vector<8x128xf32>
    %45 = vector.extract_strided_slice %44 {offsets = [0, 0], sizes = [8, 32], strides = [1, 1]} : vector<8x128xf32> to vector<8x32xf32>
    %46 = vector.extract_strided_slice %44 {offsets = [0, 32], sizes = [8, 32], strides = [1, 1]} : vector<8x128xf32> to vector<8x32xf32>
    %47 = vector.extract_strided_slice %44 {offsets = [0, 64], sizes = [8, 32], strides = [1, 1]} : vector<8x128xf32> to vector<8x32xf32>
    %cst_22 = arith.constant 2.000000e+00 : f32
    %48 = vector.broadcast %cst_22 : f32 to vector<8x32xf32>
    %49 = arith.mulf %48, %47 : vector<8x32xf32>
    %cst_23 = arith.constant 1.000000e+00 : f32
    %50 = vector.broadcast %cst_23 : f32 to vector<8x32xf32>
    %51 = arith.subf %49, %50 : vector<8x32xf32>
    %52 = vector.extract_strided_slice %44 {offsets = [0, 96], sizes = [8, 32], strides = [1, 1]} : vector<8x128xf32> to vector<8x32xf32>
    %53 = arith.mulf %46, %32 : vector<8x32xf32>
    %54 = arith.mulf %45, %51 : vector<8x32xf32>
    %55 = arith.addf %53, %54 : vector<8x32xf32>
    %56 = math.tanh %55 : vector<8x32xf32>
    %57 = arith.mulf %52, %56 : vector<8x32xf32>
    %58 = vector.extract_strided_slice %36 {offsets = [0, 128], sizes = [8, 128], strides = [1, 1]} : vector<8x256xf32> to vector<8x128xf32>
    %59 = arith.addf %58, %7 : vector<8x128xf32>
    %60 = arith.negf %59 : vector<8x128xf32>
    %61 = math.exp %60 : vector<8x128xf32>
    %cst_24 = arith.constant 1.000000e+00 : f32
    %62 = vector.broadcast %cst_24 : f32 to vector<8x128xf32>
    %63 = arith.addf %62, %61 : vector<8x128xf32>
    %64 = arith.divf %62, %63 : vector<8x128xf32>
    %65 = vector.extract_strided_slice %64 {offsets = [0, 0], sizes = [8, 32], strides = [1, 1]} : vector<8x128xf32> to vector<8x32xf32>
    %66 = vector.extract_strided_slice %64 {offsets = [0, 32], sizes = [8, 32], strides = [1, 1]} : vector<8x128xf32> to vector<8x32xf32>
    %67 = vector.extract_strided_slice %64 {offsets = [0, 64], sizes = [8, 32], strides = [1, 1]} : vector<8x128xf32> to vector<8x32xf32>
    %cst_25 = arith.constant 2.000000e+00 : f32
    %68 = vector.broadcast %cst_25 : f32 to vector<8x32xf32>
    %69 = arith.mulf %68, %67 : vector<8x32xf32>
    %cst_26 = arith.constant 1.000000e+00 : f32
    %70 = vector.broadcast %cst_26 : f32 to vector<8x32xf32>
    %71 = arith.subf %69, %70 : vector<8x32xf32>
    %72 = vector.extract_strided_slice %64 {offsets = [0, 96], sizes = [8, 32], strides = [1, 1]} : vector<8x128xf32> to vector<8x32xf32>
    %73 = arith.mulf %66, %11 : vector<8x32xf32>
    %74 = arith.mulf %65, %71 : vector<8x32xf32>
    %75 = arith.addf %73, %74 : vector<8x32xf32>
    %76 = math.tanh %75 : vector<8x32xf32>
    %77 = arith.mulf %72, %76 : vector<8x32xf32>
    %78 = tpu.concatenate %57, %77 in 1 : vector<8x32xf32>, vector<8x32xf32> -> vector<8x64xf32>
    %cst_27 = arith.constant dense<0.000000e+00> : vector<8x256xf32>
    %79 = tpu.matmul %78, %4, %cst_27 {dimension_numbers = #tpu.dot_dimension_numbers<[1], [0], [0], [1], [0, 0, 1, 1], [], []>} : vector<8x64xf32>, vector<64x256xf32>, vector<8x256xf32> -> vector<8x256xf32>
    %c16 = arith.constant 16 : index
    %c0_28 = arith.constant 0 : index
    %80 = vector.load %arg7[%c16, %c0_28] : memref<64x128xf32, #tpu.memory_space<vmem>>, vector<8x128xf32>
    %81 = vector.extract_strided_slice %79 {offsets = [0, 0], sizes = [8, 128], strides = [1, 1]} : vector<8x256xf32> to vector<8x128xf32>
    %82 = arith.addf %80, %81 : vector<8x128xf32>
    %83 = arith.negf %82 : vector<8x128xf32>
    %84 = math.exp %83 : vector<8x128xf32>
    %cst_29 = arith.constant 1.000000e+00 : f32
    %85 = vector.broadcast %cst_29 : f32 to vector<8x128xf32>
    %86 = arith.addf %85, %84 : vector<8x128xf32>
    %87 = arith.divf %85, %86 : vector<8x128xf32>
    %88 = vector.extract_strided_slice %87 {offsets = [0, 0], sizes = [8, 32], strides = [1, 1]} : vector<8x128xf32> to vector<8x32xf32>
    %89 = vector.extract_strided_slice %87 {offsets = [0, 32], sizes = [8, 32], strides = [1, 1]} : vector<8x128xf32> to vector<8x32xf32>
    %90 = vector.extract_strided_slice %87 {offsets = [0, 64], sizes = [8, 32], strides = [1, 1]} : vector<8x128xf32> to vector<8x32xf32>
    %cst_30 = arith.constant 2.000000e+00 : f32
    %91 = vector.broadcast %cst_30 : f32 to vector<8x32xf32>
    %92 = arith.mulf %91, %90 : vector<8x32xf32>
    %cst_31 = arith.constant 1.000000e+00 : f32
    %93 = vector.broadcast %cst_31 : f32 to vector<8x32xf32>
    %94 = arith.subf %92, %93 : vector<8x32xf32>
    %95 = vector.extract_strided_slice %87 {offsets = [0, 96], sizes = [8, 32], strides = [1, 1]} : vector<8x128xf32> to vector<8x32xf32>
    %96 = arith.mulf %89, %55 : vector<8x32xf32>
    %97 = arith.mulf %88, %94 : vector<8x32xf32>
    %98 = arith.addf %96, %97 : vector<8x32xf32>
    %99 = math.tanh %98 : vector<8x32xf32>
    %100 = arith.mulf %95, %99 : vector<8x32xf32>
    %101 = vector.extract_strided_slice %79 {offsets = [0, 128], sizes = [8, 128], strides = [1, 1]} : vector<8x256xf32> to vector<8x128xf32>
    %102 = arith.addf %101, %7 : vector<8x128xf32>
    %103 = arith.negf %102 : vector<8x128xf32>
    %104 = math.exp %103 : vector<8x128xf32>
    %cst_32 = arith.constant 1.000000e+00 : f32
    %105 = vector.broadcast %cst_32 : f32 to vector<8x128xf32>
    %106 = arith.addf %105, %104 : vector<8x128xf32>
    %107 = arith.divf %105, %106 : vector<8x128xf32>
    %108 = vector.extract_strided_slice %107 {offsets = [0, 0], sizes = [8, 32], strides = [1, 1]} : vector<8x128xf32> to vector<8x32xf32>
    %109 = vector.extract_strided_slice %107 {offsets = [0, 32], sizes = [8, 32], strides = [1, 1]} : vector<8x128xf32> to vector<8x32xf32>
    %110 = vector.extract_strided_slice %107 {offsets = [0, 64], sizes = [8, 32], strides = [1, 1]} : vector<8x128xf32> to vector<8x32xf32>
    %cst_33 = arith.constant 2.000000e+00 : f32
    %111 = vector.broadcast %cst_33 : f32 to vector<8x32xf32>
    %112 = arith.mulf %111, %110 : vector<8x32xf32>
    %cst_34 = arith.constant 1.000000e+00 : f32
    %113 = vector.broadcast %cst_34 : f32 to vector<8x32xf32>
    %114 = arith.subf %112, %113 : vector<8x32xf32>
    %115 = vector.extract_strided_slice %107 {offsets = [0, 96], sizes = [8, 32], strides = [1, 1]} : vector<8x128xf32> to vector<8x32xf32>
    %116 = arith.mulf %109, %75 : vector<8x32xf32>
    %117 = arith.mulf %108, %114 : vector<8x32xf32>
    %118 = arith.addf %116, %117 : vector<8x32xf32>
    %119 = math.tanh %118 : vector<8x32xf32>
    %120 = arith.mulf %115, %119 : vector<8x32xf32>
    %121 = tpu.concatenate %100, %120 in 1 : vector<8x32xf32>, vector<8x32xf32> -> vector<8x64xf32>
    %cst_35 = arith.constant dense<0.000000e+00> : vector<8x256xf32>
    %122 = tpu.matmul %121, %4, %cst_35 {dimension_numbers = #tpu.dot_dimension_numbers<[1], [0], [0], [1], [0, 0, 1, 1], [], []>} : vector<8x64xf32>, vector<64x256xf32>, vector<8x256xf32> -> vector<8x256xf32>
    %c24 = arith.constant 24 : index
    %c0_36 = arith.constant 0 : index
    %123 = vector.load %arg7[%c24, %c0_36] : memref<64x128xf32, #tpu.memory_space<vmem>>, vector<8x128xf32>
    %124 = vector.extract_strided_slice %122 {offsets = [0, 0], sizes = [8, 128], strides = [1, 1]} : vector<8x256xf32> to vector<8x128xf32>
    %125 = arith.addf %123, %124 : vector<8x128xf32>
    %126 = arith.negf %125 : vector<8x128xf32>
    %127 = math.exp %126 : vector<8x128xf32>
    %cst_37 = arith.constant 1.000000e+00 : f32
    %128 = vector.broadcast %cst_37 : f32 to vector<8x128xf32>
    %129 = arith.addf %128, %127 : vector<8x128xf32>
    %130 = arith.divf %128, %129 : vector<8x128xf32>
    %131 = vector.extract_strided_slice %130 {offsets = [0, 0], sizes = [8, 32], strides = [1, 1]} : vector<8x128xf32> to vector<8x32xf32>
    %132 = vector.extract_strided_slice %130 {offsets = [0, 32], sizes = [8, 32], strides = [1, 1]} : vector<8x128xf32> to vector<8x32xf32>
    %133 = vector.extract_strided_slice %130 {offsets = [0, 64], sizes = [8, 32], strides = [1, 1]} : vector<8x128xf32> to vector<8x32xf32>
    %cst_38 = arith.constant 2.000000e+00 : f32
    %134 = vector.broadcast %cst_38 : f32 to vector<8x32xf32>
    %135 = arith.mulf %134, %133 : vector<8x32xf32>
    %cst_39 = arith.constant 1.000000e+00 : f32
    %136 = vector.broadcast %cst_39 : f32 to vector<8x32xf32>
    %137 = arith.subf %135, %136 : vector<8x32xf32>
    %138 = vector.extract_strided_slice %130 {offsets = [0, 96], sizes = [8, 32], strides = [1, 1]} : vector<8x128xf32> to vector<8x32xf32>
    %139 = arith.mulf %132, %98 : vector<8x32xf32>
    %140 = arith.mulf %131, %137 : vector<8x32xf32>
    %141 = arith.addf %139, %140 : vector<8x32xf32>
    %142 = math.tanh %141 : vector<8x32xf32>
    %143 = arith.mulf %138, %142 : vector<8x32xf32>
    %144 = vector.extract_strided_slice %122 {offsets = [0, 128], sizes = [8, 128], strides = [1, 1]} : vector<8x256xf32> to vector<8x128xf32>
    %145 = arith.addf %144, %7 : vector<8x128xf32>
    %146 = arith.negf %145 : vector<8x128xf32>
    %147 = math.exp %146 : vector<8x128xf32>
    %cst_40 = arith.constant 1.000000e+00 : f32
    %148 = vector.broadcast %cst_40 : f32 to vector<8x128xf32>
    %149 = arith.addf %148, %147 : vector<8x128xf32>
    %150 = arith.divf %148, %149 : vector<8x128xf32>
    %151 = vector.extract_strided_slice %150 {offsets = [0, 0], sizes = [8, 32], strides = [1, 1]} : vector<8x128xf32> to vector<8x32xf32>
    %152 = vector.extract_strided_slice %150 {offsets = [0, 32], sizes = [8, 32], strides = [1, 1]} : vector<8x128xf32> to vector<8x32xf32>
    %153 = vector.extract_strided_slice %150 {offsets = [0, 64], sizes = [8, 32], strides = [1, 1]} : vector<8x128xf32> to vector<8x32xf32>
    %cst_41 = arith.constant 2.000000e+00 : f32
    %154 = vector.broadcast %cst_41 : f32 to vector<8x32xf32>
    %155 = arith.mulf %154, %153 : vector<8x32xf32>
    %cst_42 = arith.constant 1.000000e+00 : f32
    %156 = vector.broadcast %cst_42 : f32 to vector<8x32xf32>
    %157 = arith.subf %155, %156 : vector<8x32xf32>
    %158 = vector.extract_strided_slice %150 {offsets = [0, 96], sizes = [8, 32], strides = [1, 1]} : vector<8x128xf32> to vector<8x32xf32>
    %159 = arith.mulf %152, %118 : vector<8x32xf32>
    %160 = arith.mulf %151, %157 : vector<8x32xf32>
    %161 = arith.addf %159, %160 : vector<8x32xf32>
    %162 = math.tanh %161 : vector<8x32xf32>
    %163 = arith.mulf %158, %162 : vector<8x32xf32>
    %164 = tpu.concatenate %143, %163 in 1 : vector<8x32xf32>, vector<8x32xf32> -> vector<8x64xf32>
    %cst_43 = arith.constant dense<0.000000e+00> : vector<8x256xf32>
    %165 = tpu.matmul %164, %4, %cst_43 {dimension_numbers = #tpu.dot_dimension_numbers<[1], [0], [0], [1], [0, 0, 1, 1], [], []>} : vector<8x64xf32>, vector<64x256xf32>, vector<8x256xf32> -> vector<8x256xf32>
    %c32 = arith.constant 32 : index
    %c0_44 = arith.constant 0 : index
    %166 = vector.load %arg7[%c32, %c0_44] : memref<64x128xf32, #tpu.memory_space<vmem>>, vector<8x128xf32>
    %167 = vector.extract_strided_slice %165 {offsets = [0, 0], sizes = [8, 128], strides = [1, 1]} : vector<8x256xf32> to vector<8x128xf32>
    %168 = arith.addf %166, %167 : vector<8x128xf32>
    %169 = arith.negf %168 : vector<8x128xf32>
    %170 = math.exp %169 : vector<8x128xf32>
    %cst_45 = arith.constant 1.000000e+00 : f32
    %171 = vector.broadcast %cst_45 : f32 to vector<8x128xf32>
    %172 = arith.addf %171, %170 : vector<8x128xf32>
    %173 = arith.divf %171, %172 : vector<8x128xf32>
    %174 = vector.extract_strided_slice %173 {offsets = [0, 0], sizes = [8, 32], strides = [1, 1]} : vector<8x128xf32> to vector<8x32xf32>
    %175 = vector.extract_strided_slice %173 {offsets = [0, 32], sizes = [8, 32], strides = [1, 1]} : vector<8x128xf32> to vector<8x32xf32>
    %176 = vector.extract_strided_slice %173 {offsets = [0, 64], sizes = [8, 32], strides = [1, 1]} : vector<8x128xf32> to vector<8x32xf32>
    %cst_46 = arith.constant 2.000000e+00 : f32
    %177 = vector.broadcast %cst_46 : f32 to vector<8x32xf32>
    %178 = arith.mulf %177, %176 : vector<8x32xf32>
    %cst_47 = arith.constant 1.000000e+00 : f32
    %179 = vector.broadcast %cst_47 : f32 to vector<8x32xf32>
    %180 = arith.subf %178, %179 : vector<8x32xf32>
    %181 = vector.extract_strided_slice %173 {offsets = [0, 96], sizes = [8, 32], strides = [1, 1]} : vector<8x128xf32> to vector<8x32xf32>
    %182 = arith.mulf %175, %141 : vector<8x32xf32>
    %183 = arith.mulf %174, %180 : vector<8x32xf32>
    %184 = arith.addf %182, %183 : vector<8x32xf32>
    %185 = math.tanh %184 : vector<8x32xf32>
    %186 = arith.mulf %181, %185 : vector<8x32xf32>
    %187 = vector.extract_strided_slice %165 {offsets = [0, 128], sizes = [8, 128], strides = [1, 1]} : vector<8x256xf32> to vector<8x128xf32>
    %188 = arith.addf %187, %7 : vector<8x128xf32>
    %189 = arith.negf %188 : vector<8x128xf32>
    %190 = math.exp %189 : vector<8x128xf32>
    %cst_48 = arith.constant 1.000000e+00 : f32
    %191 = vector.broadcast %cst_48 : f32 to vector<8x128xf32>
    %192 = arith.addf %191, %190 : vector<8x128xf32>
    %193 = arith.divf %191, %192 : vector<8x128xf32>
    %194 = vector.extract_strided_slice %193 {offsets = [0, 0], sizes = [8, 32], strides = [1, 1]} : vector<8x128xf32> to vector<8x32xf32>
    %195 = vector.extract_strided_slice %193 {offsets = [0, 32], sizes = [8, 32], strides = [1, 1]} : vector<8x128xf32> to vector<8x32xf32>
    %196 = vector.extract_strided_slice %193 {offsets = [0, 64], sizes = [8, 32], strides = [1, 1]} : vector<8x128xf32> to vector<8x32xf32>
    %cst_49 = arith.constant 2.000000e+00 : f32
    %197 = vector.broadcast %cst_49 : f32 to vector<8x32xf32>
    %198 = arith.mulf %197, %196 : vector<8x32xf32>
    %cst_50 = arith.constant 1.000000e+00 : f32
    %199 = vector.broadcast %cst_50 : f32 to vector<8x32xf32>
    %200 = arith.subf %198, %199 : vector<8x32xf32>
    %201 = vector.extract_strided_slice %193 {offsets = [0, 96], sizes = [8, 32], strides = [1, 1]} : vector<8x128xf32> to vector<8x32xf32>
    %202 = arith.mulf %195, %161 : vector<8x32xf32>
    %203 = arith.mulf %194, %200 : vector<8x32xf32>
    %204 = arith.addf %202, %203 : vector<8x32xf32>
    %205 = math.tanh %204 : vector<8x32xf32>
    %206 = arith.mulf %201, %205 : vector<8x32xf32>
    %207 = tpu.concatenate %186, %206 in 1 : vector<8x32xf32>, vector<8x32xf32> -> vector<8x64xf32>
    %cst_51 = arith.constant dense<0.000000e+00> : vector<8x256xf32>
    %208 = tpu.matmul %207, %4, %cst_51 {dimension_numbers = #tpu.dot_dimension_numbers<[1], [0], [0], [1], [0, 0, 1, 1], [], []>} : vector<8x64xf32>, vector<64x256xf32>, vector<8x256xf32> -> vector<8x256xf32>
    %c40 = arith.constant 40 : index
    %c0_52 = arith.constant 0 : index
    %209 = vector.load %arg7[%c40, %c0_52] : memref<64x128xf32, #tpu.memory_space<vmem>>, vector<8x128xf32>
    %210 = vector.extract_strided_slice %208 {offsets = [0, 0], sizes = [8, 128], strides = [1, 1]} : vector<8x256xf32> to vector<8x128xf32>
    %211 = arith.addf %209, %210 : vector<8x128xf32>
    %212 = arith.negf %211 : vector<8x128xf32>
    %213 = math.exp %212 : vector<8x128xf32>
    %cst_53 = arith.constant 1.000000e+00 : f32
    %214 = vector.broadcast %cst_53 : f32 to vector<8x128xf32>
    %215 = arith.addf %214, %213 : vector<8x128xf32>
    %216 = arith.divf %214, %215 : vector<8x128xf32>
    %217 = vector.extract_strided_slice %216 {offsets = [0, 0], sizes = [8, 32], strides = [1, 1]} : vector<8x128xf32> to vector<8x32xf32>
    %218 = vector.extract_strided_slice %216 {offsets = [0, 32], sizes = [8, 32], strides = [1, 1]} : vector<8x128xf32> to vector<8x32xf32>
    %219 = vector.extract_strided_slice %216 {offsets = [0, 64], sizes = [8, 32], strides = [1, 1]} : vector<8x128xf32> to vector<8x32xf32>
    %cst_54 = arith.constant 2.000000e+00 : f32
    %220 = vector.broadcast %cst_54 : f32 to vector<8x32xf32>
    %221 = arith.mulf %220, %219 : vector<8x32xf32>
    %cst_55 = arith.constant 1.000000e+00 : f32
    %222 = vector.broadcast %cst_55 : f32 to vector<8x32xf32>
    %223 = arith.subf %221, %222 : vector<8x32xf32>
    %224 = vector.extract_strided_slice %216 {offsets = [0, 96], sizes = [8, 32], strides = [1, 1]} : vector<8x128xf32> to vector<8x32xf32>
    %225 = arith.mulf %218, %184 : vector<8x32xf32>
    %226 = arith.mulf %217, %223 : vector<8x32xf32>
    %227 = arith.addf %225, %226 : vector<8x32xf32>
    %228 = math.tanh %227 : vector<8x32xf32>
    %229 = arith.mulf %224, %228 : vector<8x32xf32>
    %230 = vector.extract_strided_slice %208 {offsets = [0, 128], sizes = [8, 128], strides = [1, 1]} : vector<8x256xf32> to vector<8x128xf32>
    %231 = arith.addf %230, %7 : vector<8x128xf32>
    %232 = arith.negf %231 : vector<8x128xf32>
    %233 = math.exp %232 : vector<8x128xf32>
    %cst_56 = arith.constant 1.000000e+00 : f32
    %234 = vector.broadcast %cst_56 : f32 to vector<8x128xf32>
    %235 = arith.addf %234, %233 : vector<8x128xf32>
    %236 = arith.divf %234, %235 : vector<8x128xf32>
    %237 = vector.extract_strided_slice %236 {offsets = [0, 0], sizes = [8, 32], strides = [1, 1]} : vector<8x128xf32> to vector<8x32xf32>
    %238 = vector.extract_strided_slice %236 {offsets = [0, 32], sizes = [8, 32], strides = [1, 1]} : vector<8x128xf32> to vector<8x32xf32>
    %239 = vector.extract_strided_slice %236 {offsets = [0, 64], sizes = [8, 32], strides = [1, 1]} : vector<8x128xf32> to vector<8x32xf32>
    %cst_57 = arith.constant 2.000000e+00 : f32
    %240 = vector.broadcast %cst_57 : f32 to vector<8x32xf32>
    %241 = arith.mulf %240, %239 : vector<8x32xf32>
    %cst_58 = arith.constant 1.000000e+00 : f32
    %242 = vector.broadcast %cst_58 : f32 to vector<8x32xf32>
    %243 = arith.subf %241, %242 : vector<8x32xf32>
    %244 = vector.extract_strided_slice %236 {offsets = [0, 96], sizes = [8, 32], strides = [1, 1]} : vector<8x128xf32> to vector<8x32xf32>
    %245 = arith.mulf %238, %204 : vector<8x32xf32>
    %246 = arith.mulf %237, %243 : vector<8x32xf32>
    %247 = arith.addf %245, %246 : vector<8x32xf32>
    %248 = math.tanh %247 : vector<8x32xf32>
    %249 = arith.mulf %244, %248 : vector<8x32xf32>
    %250 = tpu.concatenate %229, %249 in 1 : vector<8x32xf32>, vector<8x32xf32> -> vector<8x64xf32>
    %cst_59 = arith.constant dense<0.000000e+00> : vector<8x256xf32>
    %251 = tpu.matmul %250, %4, %cst_59 {dimension_numbers = #tpu.dot_dimension_numbers<[1], [0], [0], [1], [0, 0, 1, 1], [], []>} : vector<8x64xf32>, vector<64x256xf32>, vector<8x256xf32> -> vector<8x256xf32>
    %c48 = arith.constant 48 : index
    %c0_60 = arith.constant 0 : index
    %252 = vector.load %arg7[%c48, %c0_60] : memref<64x128xf32, #tpu.memory_space<vmem>>, vector<8x128xf32>
    %253 = vector.extract_strided_slice %251 {offsets = [0, 0], sizes = [8, 128], strides = [1, 1]} : vector<8x256xf32> to vector<8x128xf32>
    %254 = arith.addf %252, %253 : vector<8x128xf32>
    %255 = arith.negf %254 : vector<8x128xf32>
    %256 = math.exp %255 : vector<8x128xf32>
    %cst_61 = arith.constant 1.000000e+00 : f32
    %257 = vector.broadcast %cst_61 : f32 to vector<8x128xf32>
    %258 = arith.addf %257, %256 : vector<8x128xf32>
    %259 = arith.divf %257, %258 : vector<8x128xf32>
    %260 = vector.extract_strided_slice %259 {offsets = [0, 0], sizes = [8, 32], strides = [1, 1]} : vector<8x128xf32> to vector<8x32xf32>
    %261 = vector.extract_strided_slice %259 {offsets = [0, 32], sizes = [8, 32], strides = [1, 1]} : vector<8x128xf32> to vector<8x32xf32>
    %262 = vector.extract_strided_slice %259 {offsets = [0, 64], sizes = [8, 32], strides = [1, 1]} : vector<8x128xf32> to vector<8x32xf32>
    %cst_62 = arith.constant 2.000000e+00 : f32
    %263 = vector.broadcast %cst_62 : f32 to vector<8x32xf32>
    %264 = arith.mulf %263, %262 : vector<8x32xf32>
    %cst_63 = arith.constant 1.000000e+00 : f32
    %265 = vector.broadcast %cst_63 : f32 to vector<8x32xf32>
    %266 = arith.subf %264, %265 : vector<8x32xf32>
    %267 = vector.extract_strided_slice %259 {offsets = [0, 96], sizes = [8, 32], strides = [1, 1]} : vector<8x128xf32> to vector<8x32xf32>
    %268 = arith.mulf %261, %227 : vector<8x32xf32>
    %269 = arith.mulf %260, %266 : vector<8x32xf32>
    %270 = arith.addf %268, %269 : vector<8x32xf32>
    %271 = math.tanh %270 : vector<8x32xf32>
    %272 = arith.mulf %267, %271 : vector<8x32xf32>
    %273 = vector.extract_strided_slice %251 {offsets = [0, 128], sizes = [8, 128], strides = [1, 1]} : vector<8x256xf32> to vector<8x128xf32>
    %274 = arith.addf %273, %7 : vector<8x128xf32>
    %275 = arith.negf %274 : vector<8x128xf32>
    %276 = math.exp %275 : vector<8x128xf32>
    %cst_64 = arith.constant 1.000000e+00 : f32
    %277 = vector.broadcast %cst_64 : f32 to vector<8x128xf32>
    %278 = arith.addf %277, %276 : vector<8x128xf32>
    %279 = arith.divf %277, %278 : vector<8x128xf32>
    %280 = vector.extract_strided_slice %279 {offsets = [0, 0], sizes = [8, 32], strides = [1, 1]} : vector<8x128xf32> to vector<8x32xf32>
    %281 = vector.extract_strided_slice %279 {offsets = [0, 32], sizes = [8, 32], strides = [1, 1]} : vector<8x128xf32> to vector<8x32xf32>
    %282 = vector.extract_strided_slice %279 {offsets = [0, 64], sizes = [8, 32], strides = [1, 1]} : vector<8x128xf32> to vector<8x32xf32>
    %cst_65 = arith.constant 2.000000e+00 : f32
    %283 = vector.broadcast %cst_65 : f32 to vector<8x32xf32>
    %284 = arith.mulf %283, %282 : vector<8x32xf32>
    %cst_66 = arith.constant 1.000000e+00 : f32
    %285 = vector.broadcast %cst_66 : f32 to vector<8x32xf32>
    %286 = arith.subf %284, %285 : vector<8x32xf32>
    %287 = vector.extract_strided_slice %279 {offsets = [0, 96], sizes = [8, 32], strides = [1, 1]} : vector<8x128xf32> to vector<8x32xf32>
    %288 = arith.mulf %281, %247 : vector<8x32xf32>
    %289 = arith.mulf %280, %286 : vector<8x32xf32>
    %290 = arith.addf %288, %289 : vector<8x32xf32>
    %291 = math.tanh %290 : vector<8x32xf32>
    %292 = arith.mulf %287, %291 : vector<8x32xf32>
    %293 = tpu.concatenate %272, %292 in 1 : vector<8x32xf32>, vector<8x32xf32> -> vector<8x64xf32>
    %cst_67 = arith.constant dense<0.000000e+00> : vector<8x256xf32>
    %294 = tpu.matmul %293, %4, %cst_67 {dimension_numbers = #tpu.dot_dimension_numbers<[1], [0], [0], [1], [0, 0, 1, 1], [], []>} : vector<8x64xf32>, vector<64x256xf32>, vector<8x256xf32> -> vector<8x256xf32>
    %c56 = arith.constant 56 : index
    %c0_68 = arith.constant 0 : index
    %295 = vector.load %arg7[%c56, %c0_68] : memref<64x128xf32, #tpu.memory_space<vmem>>, vector<8x128xf32>
    %296 = vector.extract_strided_slice %294 {offsets = [0, 0], sizes = [8, 128], strides = [1, 1]} : vector<8x256xf32> to vector<8x128xf32>
    %297 = arith.addf %295, %296 : vector<8x128xf32>
    %298 = arith.negf %297 : vector<8x128xf32>
    %299 = math.exp %298 : vector<8x128xf32>
    %cst_69 = arith.constant 1.000000e+00 : f32
    %300 = vector.broadcast %cst_69 : f32 to vector<8x128xf32>
    %301 = arith.addf %300, %299 : vector<8x128xf32>
    %302 = arith.divf %300, %301 : vector<8x128xf32>
    %303 = vector.extract_strided_slice %302 {offsets = [0, 0], sizes = [8, 32], strides = [1, 1]} : vector<8x128xf32> to vector<8x32xf32>
    %304 = vector.extract_strided_slice %302 {offsets = [0, 32], sizes = [8, 32], strides = [1, 1]} : vector<8x128xf32> to vector<8x32xf32>
    %305 = vector.extract_strided_slice %302 {offsets = [0, 64], sizes = [8, 32], strides = [1, 1]} : vector<8x128xf32> to vector<8x32xf32>
    %cst_70 = arith.constant 2.000000e+00 : f32
    %306 = vector.broadcast %cst_70 : f32 to vector<8x32xf32>
    %307 = arith.mulf %306, %305 : vector<8x32xf32>
    %cst_71 = arith.constant 1.000000e+00 : f32
    %308 = vector.broadcast %cst_71 : f32 to vector<8x32xf32>
    %309 = arith.subf %307, %308 : vector<8x32xf32>
    %310 = vector.extract_strided_slice %302 {offsets = [0, 96], sizes = [8, 32], strides = [1, 1]} : vector<8x128xf32> to vector<8x32xf32>
    %311 = arith.mulf %304, %270 : vector<8x32xf32>
    %312 = arith.mulf %303, %309 : vector<8x32xf32>
    %313 = arith.addf %311, %312 : vector<8x32xf32>
    %314 = math.tanh %313 : vector<8x32xf32>
    %315 = arith.mulf %310, %314 : vector<8x32xf32>
    %316 = vector.extract_strided_slice %294 {offsets = [0, 128], sizes = [8, 128], strides = [1, 1]} : vector<8x256xf32> to vector<8x128xf32>
    %317 = arith.addf %316, %7 : vector<8x128xf32>
    %318 = arith.negf %317 : vector<8x128xf32>
    %319 = math.exp %318 : vector<8x128xf32>
    %cst_72 = arith.constant 1.000000e+00 : f32
    %320 = vector.broadcast %cst_72 : f32 to vector<8x128xf32>
    %321 = arith.addf %320, %319 : vector<8x128xf32>
    %322 = arith.divf %320, %321 : vector<8x128xf32>
    %323 = vector.extract_strided_slice %322 {offsets = [0, 0], sizes = [8, 32], strides = [1, 1]} : vector<8x128xf32> to vector<8x32xf32>
    %324 = vector.extract_strided_slice %322 {offsets = [0, 32], sizes = [8, 32], strides = [1, 1]} : vector<8x128xf32> to vector<8x32xf32>
    %325 = vector.extract_strided_slice %322 {offsets = [0, 64], sizes = [8, 32], strides = [1, 1]} : vector<8x128xf32> to vector<8x32xf32>
    %cst_73 = arith.constant 2.000000e+00 : f32
    %326 = vector.broadcast %cst_73 : f32 to vector<8x32xf32>
    %327 = arith.mulf %326, %325 : vector<8x32xf32>
    %cst_74 = arith.constant 1.000000e+00 : f32
    %328 = vector.broadcast %cst_74 : f32 to vector<8x32xf32>
    %329 = arith.subf %327, %328 : vector<8x32xf32>
    %330 = vector.extract_strided_slice %322 {offsets = [0, 96], sizes = [8, 32], strides = [1, 1]} : vector<8x128xf32> to vector<8x32xf32>
    %331 = arith.mulf %324, %290 : vector<8x32xf32>
    %332 = arith.mulf %323, %329 : vector<8x32xf32>
    %333 = arith.addf %331, %332 : vector<8x32xf32>
    %334 = math.tanh %333 : vector<8x32xf32>
    %335 = arith.mulf %330, %334 : vector<8x32xf32>
    %336 = tpu.concatenate %315, %335 in 1 : vector<8x32xf32>, vector<8x32xf32> -> vector<8x64xf32>
    %cst_75 = arith.constant dense<0.000000e+00> : vector<8x256xf32>
    %337 = tpu.matmul %336, %4, %cst_75 {dimension_numbers = #tpu.dot_dimension_numbers<[1], [0], [0], [1], [0, 0, 1, 1], [], []>} : vector<8x64xf32>, vector<64x256xf32>, vector<8x256xf32> -> vector<8x256xf32>
    %338 = vector.extract_strided_slice %337 {offsets = [0, 128], sizes = [8, 128], strides = [1, 1]} : vector<8x256xf32> to vector<8x128xf32>
    %339 = arith.addf %338, %7 : vector<8x128xf32>
    %340 = arith.negf %339 : vector<8x128xf32>
    %341 = math.exp %340 : vector<8x128xf32>
    %cst_76 = arith.constant 1.000000e+00 : f32
    %342 = vector.broadcast %cst_76 : f32 to vector<8x128xf32>
    %343 = arith.addf %342, %341 : vector<8x128xf32>
    %344 = arith.divf %342, %343 : vector<8x128xf32>
    %345 = vector.extract_strided_slice %344 {offsets = [0, 0], sizes = [8, 32], strides = [1, 1]} : vector<8x128xf32> to vector<8x32xf32>
    %346 = vector.extract_strided_slice %344 {offsets = [0, 32], sizes = [8, 32], strides = [1, 1]} : vector<8x128xf32> to vector<8x32xf32>
    %347 = vector.extract_strided_slice %344 {offsets = [0, 64], sizes = [8, 32], strides = [1, 1]} : vector<8x128xf32> to vector<8x32xf32>
    %cst_77 = arith.constant 2.000000e+00 : f32
    %348 = vector.broadcast %cst_77 : f32 to vector<8x32xf32>
    %349 = arith.mulf %348, %347 : vector<8x32xf32>
    %cst_78 = arith.constant 1.000000e+00 : f32
    %350 = vector.broadcast %cst_78 : f32 to vector<8x32xf32>
    %351 = arith.subf %349, %350 : vector<8x32xf32>
    %352 = vector.extract_strided_slice %344 {offsets = [0, 96], sizes = [8, 32], strides = [1, 1]} : vector<8x128xf32> to vector<8x32xf32>
    %353 = arith.mulf %346, %333 : vector<8x32xf32>
    %354 = arith.mulf %345, %351 : vector<8x32xf32>
    %355 = arith.addf %353, %354 : vector<8x32xf32>
    %356 = math.tanh %355 : vector<8x32xf32>
    %357 = arith.mulf %352, %356 : vector<8x32xf32>
    %c0_79 = arith.constant 0 : index
    %c0_80 = arith.constant 0 : index
    %358 = vector.load %arg4[%c0_79, %c0_80] : memref<32x128xf32, #tpu.memory_space<vmem>>, vector<32x128xf32>
    %cst_81 = arith.constant dense<0.000000e+00> : vector<8x128xf32>
    %359 = tpu.matmul %357, %358, %cst_81 {dimension_numbers = #tpu.dot_dimension_numbers<[1], [0], [0], [1], [0, 0, 1, 1], [], []>} : vector<8x32xf32>, vector<32x128xf32>, vector<8x128xf32> -> vector<8x128xf32>
    %c0_82 = arith.constant 0 : index
    %c0_83 = arith.constant 0 : index
    %360 = vector.load %arg5[%c0_82, %c0_83] : memref<1x128xf32, #tpu.memory_space<vmem>>, vector<1x128xf32>
    %361 = vector.broadcast %360 : vector<1x128xf32> to vector<8x128xf32>
    %362 = arith.addf %359, %361 : vector<8x128xf32>
    %c0_84 = arith.constant 0 : index
    %c0_85 = arith.constant 0 : index
    %363 = vector.load %arg6[%c0_84, %c0_85] : memref<8x128xf32, #tpu.memory_space<vmem>>, vector<8x128xf32>
    tpu.vector_store %arg6[%c0_84, %c0_85], %362 {strides = array<i32>} : memref<8x128xf32, #tpu.memory_space<vmem>>, vector<8x128xf32>,
    return
  }
}

</mosaic_0001>

<llo_original>
// kernel: lstm_forward.1
$region0: #{lstm_forward.1}
  #allocation0 [shape = 'u32[]', space=smem, size = 0x4, offset = 0x4, fixed_abs, tag = 'smem constant byte address 0x4 - core index']
  #allocation1 [shape = 'u32[144,128]{1,0:T(1,128)}', space=vmem, size = 0x12000, scoped, tag = 'internal scratch']
  #allocation2 [shape = 'f32[64,128]{1,0:T(8,128)}', space=vmem, size = 0x8000, scoped, tag = 'scratch operand']
  %s0 = inlined_call_operand.vmem [shape: f32[64,8], index: 0, kind: input, shape index: {}]
  %s1 = inlined_call_operand.vmem [shape: f32[8,128], index: 1, kind: input, shape index: {}]
  %s2 = inlined_call_operand.vmem [shape: f32[64,256], index: 2, kind: input, shape index: {}]
  %s3 = inlined_call_operand.vmem [shape: f32[1,128], index: 3, kind: input, shape index: {}]
  %s4 = inlined_call_operand.vmem [shape: f32[32,128], index: 4, kind: input, shape index: {}]
  %s5 = inlined_call_operand.vmem [shape: f32[1,128], index: 5, kind: input, shape index: {}]
  %s6 = inlined_call_operand.vmem [shape: f32[8,128], index: 6, kind: output, shape index: {}]
  %s7 = sld [smem:[#allocation0]]
  $region34: #{lstm_forward.1} parent=0
    _
  %s9 = ssub.s32 1, %s7
  %s10 = scalar_select 0, %s9, %s7
  // Predicated region
  $region2: #{lstm_forward.1} parent=0 // pred_check
    _
  $region3: #{lstm_forward.1} parent=0 // pred_check_branch
    %12 = sbr.rel (0) target = $region5
  $region4: #{lstm_forward.1} parent=0 // pred_region
    _
  $region5: #{lstm_forward.1} parent=0 // pred_fallthru
    _
  // Predicated region
  $region6: #{lstm_forward.1} parent=0 // pred_check
    _
  $region7: #{lstm_forward.1} parent=0 // pred_check_branch
    %14 = sbr.rel (0) target = $region9
  $region8: #{lstm_forward.1} parent=0 // pred_region
    _
  $region9: #{lstm_forward.1} parent=0 // pred_fallthru
    _
  // Predicated region
  $region10: #{lstm_forward.1} parent=0 // pred_check
    _
  $region11: #{lstm_forward.1} parent=0 // pred_check_branch
    %16 = sbr.rel (0) target = $region13
  $region12: #{lstm_forward.1} parent=0 // pred_region
    _
  $region13: #{lstm_forward.1} parent=0 // pred_fallthru
    _
  // Predicated region
  $region14: #{lstm_forward.1} parent=0 // pred_check
    _
  $region15: #{lstm_forward.1} parent=0 // pred_check_branch
    %18 = sbr.rel (0) target = $region17
  $region16: #{lstm_forward.1} parent=0 // pred_region
    _
  $region17: #{lstm_forward.1} parent=0 // pred_fallthru
    _
  // Predicated region
  $region18: #{lstm_forward.1} parent=0 // pred_check
    _
  $region19: #{lstm_forward.1} parent=0 // pred_check_branch
    %20 = sbr.rel (0) target = $region21
  $region20: #{lstm_forward.1} parent=0 // pred_region
    _
  $region21: #{lstm_forward.1} parent=0 // pred_fallthru
    _
  // Predicated region
  $region22: #{lstm_forward.1} parent=0 // pred_check
    _
  $region23: #{lstm_forward.1} parent=0 // pred_check_branch
    %22 = sbr.rel (0) target = $region25
  $region24: #{lstm_forward.1} parent=0 // pred_region
    _
  $region25: #{lstm_forward.1} parent=0 // pred_fallthru
    _
  %v23 = vld [vmem:[%s0] sm:$0xff]
  %v24 = vld [vmem:[%s0 + $0x8] sm:$0xff]
  %v25 = vld [vmem:[%s0 + $0x10] sm:$0xff]
  %v26 = vld [vmem:[%s0 + $0x18] sm:$0xff]
  %v27 = vld [vmem:[%s0 + $0x20] sm:$0xff]
  %v28 = vld [vmem:[%s0 + $0x28] sm:$0xff]
  %v29 = vld [vmem:[%s0 + $0x30] sm:$0xff]
  %v30 = vld [vmem:[%s0 + $0x38] sm:$0xff]
  %v31 = vld [vmem:[%s1] sm:$0xff]
  %vm32 = vcmask 64512
  %v34 = vsel %vm32, %v23, 0
  %v37 = vsel %vm32, %v24, 0
  %v40 = vsel %vm32, %v25, 0
  %v43 = vsel %vm32, %v26, 0
  %v46 = vsel %vm32, %v27, 0
  %v49 = vsel %vm32, %v28, 0
  %v52 = vsel %vm32, %v29, 0
  %v55 = vsel %vm32, %v30, 0
  %57 = vmatprep.subr.mxu0 0.0
  %58 = vmatpush1.msra.mxu0 %v31
  %59 = vmatprep.subr.mxu0 0.0
  %60 = vmatpush1.msra.mxu0 0.0
  %61 = vmatprep.subr.mxu0 0.0
  %62 = vmatpush1.msra.mxu0 0.0
  %63 = vmatprep.subr.mxu0 0.0
  %64 = vmatpush1.msra.mxu0 0.0
  %65 = vmatprep.subr.mxu0 0.0
  %66 = vmatpush1.msra.mxu0 0.0
  %67 = vmatprep.subr.mxu0 0.0
  %68 = vmatpush1.msra.mxu0 0.0
  %69 = vmatprep.subr.mxu0 0.0
  %70 = vmatpush1.msra.mxu0 0.0
  %71 = vmatprep.subr.mxu0 0.0
  %72 = vmatpush1.msra.mxu0 0.0
  %73 = vmatprep.subr.mxu0 0.0
  %74 = vmatpush1.msra.mxu0 0.0
  %75 = vmatprep.subr.mxu0 0.0
  %76 = vmatpush1.msra.mxu0 0.0
  %77 = vmatprep.subr.mxu0 0.0
  %78 = vmatpush1.msra.mxu0 0.0
  %79 = vmatprep.subr.mxu0 0.0
  %80 = vmatpush1.msra.mxu0 0.0
  %81 = vmatprep.subr.mxu0 0.0
  %82 = vmatpush1.msra.mxu0 0.0
  %83 = vmatprep.subr.mxu0 0.0
  %84 = vmatpush1.msra.mxu0 0.0
  %85 = vmatprep.subr.mxu0 0.0
  %86 = vmatpush1.msra.mxu0 0.0
  %87 = vmatprep.subr.mxu0 0.0
  %88 = vmatpush1.msra.mxu0 0.0
  %89 = vmatprep.subr.mxu0 0.0
  %90 = vmatpush1.msra.mxu0 0.0
  %91 = vmatprep.subr.mxu0 0.0
  %92 = vmatpush1.msra.mxu0 0.0
  %93 = vmatprep.subr.mxu0 0.0
  %94 = vmatpush1.msra.mxu0 0.0
  %95 = vmatprep.subr.mxu0 0.0
  %96 = vmatpush1.msra.mxu0 0.0
  %97 = vmatprep.subr.mxu0 0.0
  %98 = vmatpush1.msra.mxu0 0.0
  %99 = vmatprep.subr.mxu0 0.0
  %100 = vmatpush1.msra.mxu0 0.0
  %101 = vmatprep.subr.mxu0 0.0
  %102 = vmatpush1.msra.mxu0 0.0
  %103 = vmatprep.subr.mxu0 0.0
  %104 = vmatpush1.msra.mxu0 0.0
  %105 = vmatprep.subr.mxu0 0.0
  %106 = vmatpush1.msra.mxu0 0.0
  %107 = vmatprep.subr.mxu0 0.0
  %108 = vmatpush1.msra.mxu0 0.0
  %109 = vmatprep.subr.mxu0 0.0
  %110 = vmatpush1.msra.mxu0 0.0
  %111 = vmatprep.subr.mxu0 0.0
  %112 = vmatpush1.msra.mxu0 0.0
  %113 = vmatprep.subr.mxu0 0.0
  %114 = vmatpush1.msra.mxu0 0.0
  %115 = vmatprep.subr.mxu0 0.0
  %116 = vmatpush1.msra.mxu0 0.0
  %117 = vmatprep.subr.mxu0 0.0
  %118 = vmatpush1.msra.mxu0 0.0
  %119 = vmatprep.subr.mxu0 0.0
  %120 = vmatpush1.msra.mxu0 0.0
  %121 = vmatprep.mubr.f32.mxu0 0.0
  %122 = vmatmul.mubr.f32.gmra.mrb[0].mxu0 %v34
  %v123 = vpop.f32.mrb[0].mxu0
  %v124 = vadd.f32 0.0, %v123
  %v125 = vpop.f32.mrb[0].mxu0
  %126 = vmatprep.mubr.f32.mxu0 0.0
  %127 = vmatmul.mubr.f32.gmra.mrb[0].mxu0 %v37
  %v128 = vpop.f32.mrb[0].mxu0
  %v129 = vadd.f32 0.0, %v128
  %v130 = vpop.f32.mrb[0].mxu0
  %131 = vmatprep.mubr.f32.mxu0 0.0
  %132 = vmatmul.mubr.f32.gmra.mrb[0].mxu0 %v40
  %v133 = vpop.f32.mrb[0].mxu0
  %v134 = vadd.f32 0.0, %v133
  %v135 = vpop.f32.mrb[0].mxu0
  %136 = vmatprep.mubr.f32.mxu0 0.0
  %137 = vmatmul.mubr.f32.gmra.mrb[0].mxu0 %v43
  %v138 = vpop.f32.mrb[0].mxu0
  %v139 = vadd.f32 0.0, %v138
  %v140 = vpop.f32.mrb[0].mxu0
  %141 = vmatprep.mubr.f32.mxu0 0.0
  %142 = vmatmul.mubr.f32.gmra.mrb[0].mxu0 %v46
  %v143 = vpop.f32.mrb[0].mxu0
  %v144 = vadd.f32 0.0, %v143
  %v145 = vpop.f32.mrb[0].mxu0
  %146 = vmatprep.mubr.f32.mxu0 0.0
  %147 = vmatmul.mubr.f32.gmra.mrb[0].mxu0 %v49
  %v148 = vpop.f32.mrb[0].mxu0
  %v149 = vadd.f32 0.0, %v148
  %v150 = vpop.f32.mrb[0].mxu0
  %151 = vmatprep.mubr.f32.mxu0 0.0
  %152 = vmatmul.mubr.f32.gmra.mrb[0].mxu0 %v52
  %v153 = vpop.f32.mrb[0].mxu0
  %v154 = vadd.f32 0.0, %v153
  %v155 = vpop.f32.mrb[0].mxu0
  %156 = vmatprep.mubr.f32.mxu0 0.0
  %157 = vmatmul.mubr.f32.gmra.mrb[0].mxu0 %v55
  %v158 = vpop.f32.mrb[0].mxu0
  %v159 = vadd.f32 0.0, %v158
  %v160 = vpop.f32.mrb[0].mxu0
  %161 = vdwg.mxu0
  %162 = vst [vmem:[#allocation2] sm:$0xff] %v124
  %163 = vst [vmem:[#allocation2 + $0x8] sm:$0xff] %v129
  %164 = vst [vmem:[#allocation2 + $0x10] sm:$0xff] %v134
  %165 = vst [vmem:[#allocation2 + $0x18] sm:$0xff] %v139
  %166 = vst [vmem:[#allocation2 + $0x20] sm:$0xff] %v144
  %167 = vst [vmem:[#allocation2 + $0x28] sm:$0xff] %v149
  %168 = vst [vmem:[#allocation2 + $0x30] sm:$0xff] %v154
  %169 = vst [vmem:[#allocation2 + $0x38] sm:$0xff] %v159
  %v170 = vld [vmem:[%s2] sm:$0xff]
  %v171 = vld [vmem:[%s2 + $0x8] sm:$0xff]
  %v172 = vld [vmem:[%s2 + $0x10] sm:$0xff]
  %v173 = vld [vmem:[%s2 + $0x18] sm:$0xff]
  %v174 = vld [vmem:[%s2 + $0x20] sm:$0xff]
  %v175 = vld [vmem:[%s2 + $0x28] sm:$0xff]
  %v176 = vld [vmem:[%s2 + $0x30] sm:$0xff]
  %v177 = vld [vmem:[%s2 + $0x38] sm:$0xff]
  %v178 = vld [vmem:[%s2 + $0x40] sm:$0xff]
  %v179 = vld [vmem:[%s2 + $0x48] sm:$0xff]
  %v180 = vld [vmem:[%s2 + $0x50] sm:$0xff]
  %v181 = vld [vmem:[%s2 + $0x58] sm:$0xff]
  %v182 = vld [vmem:[%s2 + $0x60] sm:$0xff]
  %v183 = vld [vmem:[%s2 + $0x68] sm:$0xff]
  %v184 = vld [vmem:[%s2 + $0x70] sm:$0xff]
  %v185 = vld [vmem:[%s2 + $0x78] sm:$0xff]
  %v186 = vld [vmem:[%s3] sm:$0x1]
  %v188 = vlaneseq
  %v189 = vshrl.u32 %v188, 7
  %v190 = vsub.s32 0, %v189
  %v191 = vrot.slane %v186, %v190
  %vm193 = vcmask 523264
  %v195 = vsel %vm193, 0.0, 0
  %197 = vmatprep.subr.mxu0 %v171
  %198 = vmatpush1.msra.mxu0 %v170
  %199 = vmatprep.subr.mxu0 %v173
  %200 = vmatpush1.msra.mxu0 %v172
  %201 = vmatprep.subr.mxu0 %v175
  %202 = vmatpush1.msra.mxu0 %v174
  %203 = vmatprep.subr.mxu0 %v177
  %204 = vmatpush1.msra.mxu0 %v176
  %205 = vmatprep.subr.mxu0 %v179
  %206 = vmatpush1.msra.mxu0 %v178
  %207 = vmatprep.subr.mxu0 %v181
  %208 = vmatpush1.msra.mxu0 %v180
  %209 = vmatprep.subr.mxu0 %v183
  %210 = vmatpush1.msra.mxu0 %v182
  %211 = vmatprep.subr.mxu0 %v185
  %212 = vmatpush1.msra.mxu0 %v184
  %213 = vmatprep.subr.mxu0 0.0
  %214 = vmatpush1.msra.mxu0 0.0
  %215 = vmatprep.subr.mxu0 0.0
  %216 = vmatpush1.msra.mxu0 0.0
  %217 = vmatprep.subr.mxu0 0.0
  %218 = vmatpush1.msra.mxu0 0.0
  %219 = vmatprep.subr.mxu0 0.0
  %220 = vmatpush1.msra.mxu0 0.0
  %221 = vmatprep.subr.mxu0 0.0
  %222 = vmatpush1.msra.mxu0 0.0
  %223 = vmatprep.subr.mxu0 0.0
  %224 = vmatpush1.msra.mxu0 0.0
  %225 = vmatprep.subr.mxu0 0.0
  %226 = vmatpush1.msra.mxu0 0.0
  %227 = vmatprep.subr.mxu0 0.0
  %228 = vmatpush1.msra.mxu0 0.0
  %229 = vmatprep.subr.mxu0 0.0
  %230 = vmatpush1.msra.mxu0 0.0
  %231 = vmatprep.subr.mxu0 0.0
  %232 = vmatpush1.msra.mxu0 0.0
  %233 = vmatprep.subr.mxu0 0.0
  %234 = vmatpush1.msra.mxu0 0.0
  %235 = vmatprep.subr.mxu0 0.0
  %236 = vmatpush1.msra.mxu0 0.0
  %237 = vmatprep.subr.mxu0 0.0
  %238 = vmatpush1.msra.mxu0 0.0
  %239 = vmatprep.subr.mxu0 0.0
  %240 = vmatpush1.msra.mxu0 0.0
  %241 = vmatprep.subr.mxu0 0.0
  %242 = vmatpush1.msra.mxu0 0.0
  %243 = vmatprep.subr.mxu0 0.0
  %244 = vmatpush1.msra.mxu0 0.0
  %245 = vmatprep.subr.mxu0 0.0
  %246 = vmatpush1.msra.mxu0 0.0
  %247 = vmatprep.subr.mxu0 0.0
  %248 = vmatpush1.msra.mxu0 0.0
  %249 = vmatprep.subr.mxu0 0.0
  %250 = vmatpush1.msra.mxu0 0.0
  %251 = vmatprep.subr.mxu0 0.0
  %252 = vmatpush1.msra.mxu0 0.0
  %253 = vmatprep.subr.mxu0 0.0
  %254 = vmatpush1.msra.mxu0 0.0
  %255 = vmatprep.subr.mxu0 0.0
  %256 = vmatpush1.msra.mxu0 0.0
  %257 = vmatprep.subr.mxu0 0.0
  %258 = vmatpush1.msra.mxu0 0.0
  %259 = vmatprep.subr.mxu0 0.0
  %260 = vmatpush1.msra.mxu0 0.0
  %261 = vmatprep.mubr.f32.mxu0 0.0
  %262 = vmatmul.mubr.f32.gmra.mrb[0].mxu0 %v195
  %v263 = vpop.f32.mrb[0].mxu0
  %v264 = vadd.f32 0.0, %v263
  %v265 = vpop.f32.mrb[0].mxu0
  %266 = vdwg.mxu0
  %v267 = vld [vmem:[#allocation2] sm:$0xff]
  %v268 = vadd.f32 %v267, %v264
  %v269 = vxor.u32 %v268, 2147483648
  %v270 = vmul.f32 %v269, 1.442695
  %v271 = vpow.pop %v270
  %v272 = vadd.f32 %v271, 1.0
  %v273 = vrcp.pop %v272
  %v274 = vmul.f32 1.0, %v273
  %v275 = vmul.f32 %v274, 2.0
  %v276 = vsub.f32 %v275, 1.0
  %v277 = vmul.f32 %v274, 0.0
  %279 = vrot.lane.b32.xlu0 %v276, 64
  %v280 = vpop.permute.xlu0 %279
  %v282 = vmul.f32 %v274, %v280
  %284 = vrot.lane.b32.xlu0 %v282, 32
  %v285 = vpop.permute.xlu0 %284
  %v287 = vadd.f32 %v277, %v285
  %v288 = vtanh.pop %v287
  %290 = vrot.lane.b32.xlu0 %v288, 64
  %v291 = vpop.permute.xlu0 %290
  %v293 = vmul.f32 %v274, %v291
  %295 = vrot.lane.b32.xlu0 %v293, 32
  %v296 = vpop.permute.xlu0 %295
  %vm298 = vcmask 261120
  %v299 = vsel %vm298, %v296, 0.0
  %v301 = vsel %vm193, %v299, 0
  %303 = vmatprep.subr.mxu0 %v171
  %304 = vmatpush1.msra.mxu0 %v170
  %305 = vmatprep.subr.mxu0 %v173
  %306 = vmatpush1.msra.mxu0 %v172
  %307 = vmatprep.subr.mxu0 %v175
  %308 = vmatpush1.msra.mxu0 %v174
  %309 = vmatprep.subr.mxu0 %v177
  %310 = vmatpush1.msra.mxu0 %v176
  %311 = vmatprep.subr.mxu0 %v179
  %312 = vmatpush1.msra.mxu0 %v178
  %313 = vmatprep.subr.mxu0 %v181
  %314 = vmatpush1.msra.mxu0 %v180
  %315 = vmatprep.subr.mxu0 %v183
  %316 = vmatpush1.msra.mxu0 %v182
  %317 = vmatprep.subr.mxu0 %v185
  %318 = vmatpush1.msra.mxu0 %v184
  %319 = vmatprep.subr.mxu0 0.0
  %320 = vmatpush1.msra.mxu0 0.0
  %321 = vmatprep.subr.mxu0 0.0
  %322 = vmatpush1.msra.mxu0 0.0
  %323 = vmatprep.subr.mxu0 0.0
  %324 = vmatpush1.msra.mxu0 0.0
  %325 = vmatprep.subr.mxu0 0.0
  %326 = vmatpush1.msra.mxu0 0.0
  %327 = vmatprep.subr.mxu0 0.0
  %328 = vmatpush1.msra.mxu0 0.0
  %329 = vmatprep.subr.mxu0 0.0
  %330 = vmatpush1.msra.mxu0 0.0
  %331 = vmatprep.subr.mxu0 0.0
  %332 = vmatpush1.msra.mxu0 0.0
  %333 = vmatprep.subr.mxu0 0.0
  %334 = vmatpush1.msra.mxu0 0.0
  %335 = vmatprep.subr.mxu0 0.0
  %336 = vmatpush1.msra.mxu0 0.0
  %337 = vmatprep.subr.mxu0 0.0
  %338 = vmatpush1.msra.mxu0 0.0
  %339 = vmatprep.subr.mxu0 0.0
  %340 = vmatpush1.msra.mxu0 0.0
  %341 = vmatprep.subr.mxu0 0.0
  %342 = vmatpush1.msra.mxu0 0.0
  %343 = vmatprep.subr.mxu0 0.0
  %344 = vmatpush1.msra.mxu0 0.0
  %345 = vmatprep.subr.mxu0 0.0
  %346 = vmatpush1.msra.mxu0 0.0
  %347 = vmatprep.subr.mxu0 0.0
  %348 = vmatpush1.msra.mxu0 0.0
  %349 = vmatprep.subr.mxu0 0.0
  %350 = vmatpush1.msra.mxu0 0.0
  %351 = vmatprep.subr.mxu0 0.0
  %352 = vmatpush1.msra.mxu0 0.0
  %353 = vmatprep.subr.mxu0 0.0
  %354 = vmatpush1.msra.mxu0 0.0
  %355 = vmatprep.subr.mxu0 0.0
  %356 = vmatpush1.msra.mxu0 0.0
  %357 = vmatprep.subr.mxu0 0.0
  %358 = vmatpush1.msra.mxu0 0.0
  %359 = vmatprep.subr.mxu0 0.0
  %360 = vmatpush1.msra.mxu0 0.0
  %361 = vmatprep.subr.mxu0 0.0
  %362 = vmatpush1.msra.mxu0 0.0
  %363 = vmatprep.subr.mxu0 0.0
  %364 = vmatpush1.msra.mxu0 0.0
  %365 = vmatprep.subr.mxu0 0.0
  %366 = vmatpush1.msra.mxu0 0.0
  %367 = vmatprep.mubr.f32.mxu0 0.0
  %368 = vmatmul.mubr.f32.gmra.mrb[0].mxu0 %v301
  %v369 = vpop.f32.mrb[0].mxu0
  %v370 = vadd.f32 0.0, %v369
  %v371 = vpop.f32.mrb[0].mxu0
  %v372 = vadd.f32 0.0, %v371
  %373 = vdwg.mxu0
  %v374 = vld [vmem:[#allocation2 + $0x8] sm:$0xff]
  %v375 = vadd.f32 %v374, %v370
  %v376 = vxor.u32 %v375, 2147483648
  %v377 = vmul.f32 %v376, 1.442695
  %v378 = vpow.pop %v377
  %v379 = vadd.f32 %v378, 1.0
  %v380 = vrcp.pop %v379
  %v381 = vmul.f32 1.0, %v380
  %v382 = vmul.f32 %v381, 2.0
  %v383 = vsub.f32 %v382, 1.0
  %v384 = vmul.f32 %v381, %v287
  %386 = vrot.lane.b32.xlu0 %v383, 64
  %v387 = vpop.permute.xlu0 %386
  %v389 = vmul.f32 %v381, %v387
  %391 = vrot.lane.b32.xlu0 %v389, 32
  %v392 = vpop.permute.xlu0 %391
  %v394 = vadd.f32 %v384, %v392
  %v395 = vtanh.pop %v394
  %397 = vrot.lane.b32.xlu0 %v395, 64
  %v398 = vpop.permute.xlu0 %397
  %v400 = vmul.f32 %v381, %v398
  %v401 = vadd.f32 %v372, %v191
  %v402 = vxor.u32 %v401, 2147483648
  %v403 = vmul.f32 %v402, 1.442695
  %v404 = vpow.pop %v403
  %v405 = vadd.f32 %v404, 1.0
  %v406 = vrcp.pop %v405
  %v407 = vmul.f32 1.0, %v406
  %v408 = vmul.f32 %v407, 2.0
  %v409 = vsub.f32 %v408, 1.0
  %v410 = vmul.f32 %v407, 0.0
  %412 = vrot.lane.b32.xlu0 %v409, 64
  %v413 = vpop.permute.xlu0 %412
  %v415 = vmul.f32 %v407, %v413
  %417 = vrot.lane.b32.xlu0 %v415, 32
  %v418 = vpop.permute.xlu0 %417
  %v420 = vadd.f32 %v410, %v418
  %v421 = vtanh.pop %v420
  %423 = vrot.lane.b32.xlu0 %v421, 64
  %v424 = vpop.permute.xlu0 %423
  %v426 = vmul.f32 %v407, %v424
  %428 = vrot.lane.b32.xlu0 %v400, 32
  %v429 = vpop.permute.xlu0 %428
  %432 = vrot.lane.b32.xlu0 %v426, 64
  %v433 = vpop.permute.xlu0 %432
  %v435 = vsel %vm298, %v429, %v433
  %v437 = vsel %vm193, %v435, 0
  %439 = vmatprep.subr.mxu0 %v171
  %440 = vmatpush1.msra.mxu0 %v170
  %441 = vmatprep.subr.mxu0 %v173
  %442 = vmatpush1.msra.mxu0 %v172
  %443 = vmatprep.subr.mxu0 %v175
  %444 = vmatpush1.msra.mxu0 %v174
  %445 = vmatprep.subr.mxu0 %v177
  %446 = vmatpush1.msra.mxu0 %v176
  %447 = vmatprep.subr.mxu0 %v179
  %448 = vmatpush1.msra.mxu0 %v178
  %449 = vmatprep.subr.mxu0 %v181
  %450 = vmatpush1.msra.mxu0 %v180
  %451 = vmatprep.subr.mxu0 %v183
  %452 = vmatpush1.msra.mxu0 %v182
  %453 = vmatprep.subr.mxu0 %v185
  %454 = vmatpush1.msra.mxu0 %v184
  %455 = vmatprep.subr.mxu0 0.0
  %456 = vmatpush1.msra.mxu0 0.0
  %457 = vmatprep.subr.mxu0 0.0
  %458 = vmatpush1.msra.mxu0 0.0
  %459 = vmatprep.subr.mxu0 0.0
  %460 = vmatpush1.msra.mxu0 0.0
  %461 = vmatprep.subr.mxu0 0.0
  %462 = vmatpush1.msra.mxu0 0.0
  %463 = vmatprep.subr.mxu0 0.0
  %464 = vmatpush1.msra.mxu0 0.0
  %465 = vmatprep.subr.mxu0 0.0
  %466 = vmatpush1.msra.mxu0 0.0
  %467 = vmatprep.subr.mxu0 0.0
  %468 = vmatpush1.msra.mxu0 0.0
  %469 = vmatprep.subr.mxu0 0.0
  %470 = vmatpush1.msra.mxu0 0.0
  %471 = vmatprep.subr.mxu0 0.0
  %472 = vmatpush1.msra.mxu0 0.0
  %473 = vmatprep.subr.mxu0 0.0
  %474 = vmatpush1.msra.mxu0 0.0
  %475 = vmatprep.subr.mxu0 0.0
  %476 = vmatpush1.msra.mxu0 0.0
  %477 = vmatprep.subr.mxu0 0.0
  %478 = vmatpush1.msra.mxu0 0.0
  %479 = vmatprep.subr.mxu0 0.0
  %480 = vmatpush1.msra.mxu0 0.0
  %481 = vmatprep.subr.mxu0 0.0
  %482 = vmatpush1.msra.mxu0 0.0
  %483 = vmatprep.subr.mxu0 0.0
  %484 = vmatpush1.msra.mxu0 0.0
  %485 = vmatprep.subr.mxu0 0.0
  %486 = vmatpush1.msra.mxu0 0.0
  %487 = vmatprep.subr.mxu0 0.0
  %488 = vmatpush1.msra.mxu0 0.0
  %489 = vmatprep.subr.mxu0 0.0
  %490 = vmatpush1.msra.mxu0 0.0
  %491 = vmatprep.subr.mxu0 0.0
  %492 = vmatpush1.msra.mxu0 0.0
  %493 = vmatprep.subr.mxu0 0.0
  %494 = vmatpush1.msra.mxu0 0.0
  %495 = vmatprep.subr.mxu0 0.0
  %496 = vmatpush1.msra.mxu0 0.0
  %497 = vmatprep.subr.mxu0 0.0
  %498 = vmatpush1.msra.mxu0 0.0
  %499 = vmatprep.subr.mxu0 0.0
  %500 = vmatpush1.msra.mxu0 0.0
  %501 = vmatprep.subr.mxu0 0.0
  %502 = vmatpush1.msra.mxu0 0.0
  %503 = vmatprep.mubr.f32.mxu0 0.0
  %504 = vmatmul.mubr.f32.gmra.mrb[0].mxu0 %v437
  %v505 = vpop.f32.mrb[0].mxu0
  %v506 = vadd.f32 0.0, %v505
  %v507 = vpop.f32.mrb[0].mxu0
  %v508 = vadd.f32 0.0, %v507
  %509 = vdwg.mxu0
  %v510 = vld [vmem:[#allocation2 + $0x10] sm:$0xff]
  %v511 = vadd.f32 %v510, %v506
  %v512 = vxor.u32 %v511, 2147483648
  %v513 = vmul.f32 %v512, 1.442695
  %v514 = vpow.pop %v513
  %v515 = vadd.f32 %v514, 1.0
  %v516 = vrcp.pop %v515
  %v517 = vmul.f32 1.0, %v516
  %v518 = vmul.f32 %v517, 2.0
  %v519 = vsub.f32 %v518, 1.0
  %v520 = vmul.f32 %v517, %v394
  %522 = vrot.lane.b32.xlu0 %v519, 64
  %v523 = vpop.permute.xlu0 %522
  %v525 = vmul.f32 %v517, %v523
  %527 = vrot.lane.b32.xlu0 %v525, 32
  %v528 = vpop.permute.xlu0 %527
  %v530 = vadd.f32 %v520, %v528
  %v531 = vtanh.pop %v530
  %533 = vrot.lane.b32.xlu0 %v531, 64
  %v534 = vpop.permute.xlu0 %533
  %v536 = vmul.f32 %v517, %v534
  %v537 = vadd.f32 %v508, %v191
  %v538 = vxor.u32 %v537, 2147483648
  %v539 = vmul.f32 %v538, 1.442695
  %v540 = vpow.pop %v539
  %v541 = vadd.f32 %v540, 1.0
  %v542 = vrcp.pop %v541
  %v543 = vmul.f32 1.0, %v542
  %v544 = vmul.f32 %v543, 2.0
  %v545 = vsub.f32 %v544, 1.0
  %v546 = vmul.f32 %v543, %v420
  %548 = vrot.lane.b32.xlu0 %v545, 64
  %v549 = vpop.permute.xlu0 %548
  %v551 = vmul.f32 %v543, %v549
  %553 = vrot.lane.b32.xlu0 %v551, 32
  %v554 = vpop.permute.xlu0 %553
  %v556 = vadd.f32 %v546, %v554
  %v557 = vtanh.pop %v556
  %559 = vrot.lane.b32.xlu0 %v557, 64
  %v560 = vpop.permute.xlu0 %559
  %v562 = vmul.f32 %v543, %v560
  %564 = vrot.lane.b32.xlu0 %v536, 32
  %v565 = vpop.permute.xlu0 %564
  %568 = vrot.lane.b32.xlu0 %v562, 64
  %v569 = vpop.permute.xlu0 %568
  %v571 = vsel %vm298, %v565, %v569
  %v573 = vsel %vm193, %v571, 0
  %575 = vmatprep.subr.mxu0 %v171
  %576 = vmatpush1.msra.mxu0 %v170
  %577 = vmatprep.subr.mxu0 %v173
  %578 = vmatpush1.msra.mxu0 %v172
  %579 = vmatprep.subr.mxu0 %v175
  %580 = vmatpush1.msra.mxu0 %v174
  %581 = vmatprep.subr.mxu0 %v177
  %582 = vmatpush1.msra.mxu0 %v176
  %583 = vmatprep.subr.mxu0 %v179
  %584 = vmatpush1.msra.mxu0 %v178
  %585 = vmatprep.subr.mxu0 %v181
  %586 = vmatpush1.msra.mxu0 %v180
  %587 = vmatprep.subr.mxu0 %v183
  %588 = vmatpush1.msra.mxu0 %v182
  %589 = vmatprep.subr.mxu0 %v185
  %590 = vmatpush1.msra.mxu0 %v184
  %591 = vmatprep.subr.mxu0 0.0
  %592 = vmatpush1.msra.mxu0 0.0
  %593 = vmatprep.subr.mxu0 0.0
  %594 = vmatpush1.msra.mxu0 0.0
  %595 = vmatprep.subr.mxu0 0.0
  %596 = vmatpush1.msra.mxu0 0.0
  %597 = vmatprep.subr.mxu0 0.0
  %598 = vmatpush1.msra.mxu0 0.0
  %599 = vmatprep.subr.mxu0 0.0
  %600 = vmatpush1.msra.mxu0 0.0
  %601 = vmatprep.subr.mxu0 0.0
  %602 = vmatpush1.msra.mxu0 0.0
  %603 = vmatprep.subr.mxu0 0.0
  %604 = vmatpush1.msra.mxu0 0.0
  %605 = vmatprep.subr.mxu0 0.0
  %606 = vmatpush1.msra.mxu0 0.0
  %607 = vmatprep.subr.mxu0 0.0
  %608 = vmatpush1.msra.mxu0 0.0
  %609 = vmatprep.subr.mxu0 0.0
  %610 = vmatpush1.msra.mxu0 0.0
  %611 = vmatprep.subr.mxu0 0.0
  %612 = vmatpush1.msra.mxu0 0.0
  %613 = vmatprep.subr.mxu0 0.0
  %614 = vmatpush1.msra.mxu0 0.0
  %615 = vmatprep.subr.mxu0 0.0
  %616 = vmatpush1.msra.mxu0 0.0
  %617 = vmatprep.subr.mxu0 0.0
  %618 = vmatpush1.msra.mxu0 0.0
  %619 = vmatprep.subr.mxu0 0.0
  %620 = vmatpush1.msra.mxu0 0.0
  %621 = vmatprep.subr.mxu0 0.0
  %622 = vmatpush1.msra.mxu0 0.0
  %623 = vmatprep.subr.mxu0 0.0
  %624 = vmatpush1.msra.mxu0 0.0
  %625 = vmatprep.subr.mxu0 0.0
  %626 = vmatpush1.msra.mxu0 0.0
  %627 = vmatprep.subr.mxu0 0.0
  %628 = vmatpush1.msra.mxu0 0.0
  %629 = vmatprep.subr.mxu0 0.0
  %630 = vmatpush1.msra.mxu0 0.0
  %631 = vmatprep.subr.mxu0 0.0
  %632 = vmatpush1.msra.mxu0 0.0
  %633 = vmatprep.subr.mxu0 0.0
  %634 = vmatpush1.msra.mxu0 0.0
  %635 = vmatprep.subr.mxu0 0.0
  %636 = vmatpush1.msra.mxu0 0.0
  %637 = vmatprep.subr.mxu0 0.0
  %638 = vmatpush1.msra.mxu0 0.0
  %639 = vmatprep.mubr.f32.mxu0 0.0
  %640 = vmatmul.mubr.f32.gmra.mrb[0].mxu0 %v573
  %v641 = vpop.f32.mrb[0].mxu0
  %v642 = vadd.f32 0.0, %v641
  %v643 = vpop.f32.mrb[0].mxu0
  %v644 = vadd.f32 0.0, %v643
  %645 = vdwg.mxu0
  %v646 = vld [vmem:[#allocation2 + $0x18] sm:$0xff]
  %v647 = vadd.f32 %v646, %v642
  %v648 = vxor.u32 %v647, 2147483648
  %v649 = vmul.f32 %v648, 1.442695
  %v650 = vpow.pop %v649
  %v651 = vadd.f32 %v650, 1.0
  %v652 = vrcp.pop %v651
  %v653 = vmul.f32 1.0, %v652
  %v654 = vmul.f32 %v653, 2.0
  %v655 = vsub.f32 %v654, 1.0
  %v656 = vmul.f32 %v653, %v530
  %658 = vrot.lane.b32.xlu0 %v655, 64
  %v659 = vpop.permute.xlu0 %658
  %v661 = vmul.f32 %v653, %v659
  %663 = vrot.lane.b32.xlu0 %v661, 32
  %v664 = vpop.permute.xlu0 %663
  %v666 = vadd.f32 %v656, %v664
  %v667 = vtanh.pop %v666
  %669 = vrot.lane.b32.xlu0 %v667, 64
  %v670 = vpop.permute.xlu0 %669
  %v672 = vmul.f32 %v653, %v670
  %v673 = vadd.f32 %v644, %v191
  %v674 = vxor.u32 %v673, 2147483648
  %v675 = vmul.f32 %v674, 1.442695
  %v676 = vpow.pop %v675
  %v677 = vadd.f32 %v676, 1.0
  %v678 = vrcp.pop %v677
  %v679 = vmul.f32 1.0, %v678
  %v680 = vmul.f32 %v679, 2.0
  %v681 = vsub.f32 %v680, 1.0
  %v682 = vmul.f32 %v679, %v556
  %684 = vrot.lane.b32.xlu0 %v681, 64
  %v685 = vpop.permute.xlu0 %684
  %v687 = vmul.f32 %v679, %v685
  %689 = vrot.lane.b32.xlu0 %v687, 32
  %v690 = vpop.permute.xlu0 %689
  %v692 = vadd.f32 %v682, %v690
  %v693 = vtanh.pop %v692
  %695 = vrot.lane.b32.xlu0 %v693, 64
  %v696 = vpop.permute.xlu0 %695
  %v698 = vmul.f32 %v679, %v696
  %700 = vrot.lane.b32.xlu0 %v672, 32
  %v701 = vpop.permute.xlu0 %700
  %704 = vrot.lane.b32.xlu0 %v698, 64
  %v705 = vpop.permute.xlu0 %704
  %v707 = vsel %vm298, %v701, %v705
  %v709 = vsel %vm193, %v707, 0
  %711 = vmatprep.subr.mxu0 %v171
  %712 = vmatpush1.msra.mxu0 %v170
  %713 = vmatprep.subr.mxu0 %v173
  %714 = vmatpush1.msra.mxu0 %v172
  %715 = vmatprep.subr.mxu0 %v175
  %716 = vmatpush1.msra.mxu0 %v174
  %717 = vmatprep.subr.mxu0 %v177
  %718 = vmatpush1.msra.mxu0 %v176
  %719 = vmatprep.subr.mxu0 %v179
  %720 = vmatpush1.msra.mxu0 %v178
  %721 = vmatprep.subr.mxu0 %v181
  %722 = vmatpush1.msra.mxu0 %v180
  %723 = vmatprep.subr.mxu0 %v183
  %724 = vmatpush1.msra.mxu0 %v182
  %725 = vmatprep.subr.mxu0 %v185
  %726 = vmatpush1.msra.mxu0 %v184
  %727 = vmatprep.subr.mxu0 0.0
  %728 = vmatpush1.msra.mxu0 0.0
  %729 = vmatprep.subr.mxu0 0.0
  %730 = vmatpush1.msra.mxu0 0.0
  %731 = vmatprep.subr.mxu0 0.0
  %732 = vmatpush1.msra.mxu0 0.0
  %733 = vmatprep.subr.mxu0 0.0
  %734 = vmatpush1.msra.mxu0 0.0
  %735 = vmatprep.subr.mxu0 0.0
  %736 = vmatpush1.msra.mxu0 0.0
  %737 = vmatprep.subr.mxu0 0.0
  %738 = vmatpush1.msra.mxu0 0.0
  %739 = vmatprep.subr.mxu0 0.0
  %740 = vmatpush1.msra.mxu0 0.0
  %741 = vmatprep.subr.mxu0 0.0
  %742 = vmatpush1.msra.mxu0 0.0
  %743 = vmatprep.subr.mxu0 0.0
  %744 = vmatpush1.msra.mxu0 0.0
  %745 = vmatprep.subr.mxu0 0.0
  %746 = vmatpush1.msra.mxu0 0.0
  %747 = vmatprep.subr.mxu0 0.0
  %748 = vmatpush1.msra.mxu0 0.0
  %749 = vmatprep.subr.mxu0 0.0
  %750 = vmatpush1.msra.mxu0 0.0
  %751 = vmatprep.subr.mxu0 0.0
  %752 = vmatpush1.msra.mxu0 0.0
  %753 = vmatprep.subr.mxu0 0.0
  %754 = vmatpush1.msra.mxu0 0.0
  %755 = vmatprep.subr.mxu0 0.0
  %756 = vmatpush1.msra.mxu0 0.0
  %757 = vmatprep.subr.mxu0 0.0
  %758 = vmatpush1.msra.mxu0 0.0
  %759 = vmatprep.subr.mxu0 0.0
  %760 = vmatpush1.msra.mxu0 0.0
  %761 = vmatprep.subr.mxu0 0.0
  %762 = vmatpush1.msra.mxu0 0.0
  %763 = vmatprep.subr.mxu0 0.0
  %764 = vmatpush1.msra.mxu0 0.0
  %765 = vmatprep.subr.mxu0 0.0
  %766 = vmatpush1.msra.mxu0 0.0
  %767 = vmatprep.subr.mxu0 0.0
  %768 = vmatpush1.msra.mxu0 0.0
  %769 = vmatprep.subr.mxu0 0.0
  %770 = vmatpush1.msra.mxu0 0.0
  %771 = vmatprep.subr.mxu0 0.0
  %772 = vmatpush1.msra.mxu0 0.0
  %773 = vmatprep.subr.mxu0 0.0
  %774 = vmatpush1.msra.mxu0 0.0
  %775 = vmatprep.mubr.f32.mxu0 0.0
  %776 = vmatmul.mubr.f32.gmra.mrb[0].mxu0 %v709
  %v777 = vpop.f32.mrb[0].mxu0
  %v778 = vadd.f32 0.0, %v777
  %v779 = vpop.f32.mrb[0].mxu0
  %v780 = vadd.f32 0.0, %v779
  %781 = vdwg.mxu0
  %v782 = vld [vmem:[#allocation2 + $0x20] sm:$0xff]
  %v783 = vadd.f32 %v782, %v778
  %v784 = vxor.u32 %v783, 2147483648
  %v785 = vmul.f32 %v784, 1.442695
  %v786 = vpow.pop %v785
  %v787 = vadd.f32 %v786, 1.0
  %v788 = vrcp.pop %v787
  %v789 = vmul.f32 1.0, %v788
  %v790 = vmul.f32 %v789, 2.0
  %v791 = vsub.f32 %v790, 1.0
  %v792 = vmul.f32 %v789, %v666
  %794 = vrot.lane.b32.xlu0 %v791, 64
  %v795 = vpop.permute.xlu0 %794
  %v797 = vmul.f32 %v789, %v795
  %799 = vrot.lane.b32.xlu0 %v797, 32
  %v800 = vpop.permute.xlu0 %799
  %v802 = vadd.f32 %v792, %v800
  %v803 = vtanh.pop %v802
  %805 = vrot.lane.b32.xlu0 %v803, 64
  %v806 = vpop.permute.xlu0 %805
  %v808 = vmul.f32 %v789, %v806
  %v809 = vadd.f32 %v780, %v191
  %v810 = vxor.u32 %v809, 2147483648
  %v811 = vmul.f32 %v810, 1.442695
  %v812 = vpow.pop %v811
  %v813 = vadd.f32 %v812, 1.0
  %v814 = vrcp.pop %v813
  %v815 = vmul.f32 1.0, %v814
  %v816 = vmul.f32 %v815, 2.0
  %v817 = vsub.f32 %v816, 1.0
  %v818 = vmul.f32 %v815, %v692
  %820 = vrot.lane.b32.xlu0 %v817, 64
  %v821 = vpop.permute.xlu0 %820
  %v823 = vmul.f32 %v815, %v821
  %825 = vrot.lane.b32.xlu0 %v823, 32
  %v826 = vpop.permute.xlu0 %825
  %v828 = vadd.f32 %v818, %v826
  %v829 = vtanh.pop %v828
  %831 = vrot.lane.b32.xlu0 %v829, 64
  %v832 = vpop.permute.xlu0 %831
  %v834 = vmul.f32 %v815, %v832
  %836 = vrot.lane.b32.xlu0 %v808, 32
  %v837 = vpop.permute.xlu0 %836
  %840 = vrot.lane.b32.xlu0 %v834, 64
  %v841 = vpop.permute.xlu0 %840
  %v843 = vsel %vm298, %v837, %v841
  %v845 = vsel %vm193, %v843, 0
  %847 = vmatprep.subr.mxu0 %v171
  %848 = vmatpush1.msra.mxu0 %v170
  %849 = vmatprep.subr.mxu0 %v173
  %850 = vmatpush1.msra.mxu0 %v172
  %851 = vmatprep.subr.mxu0 %v175
  %852 = vmatpush1.msra.mxu0 %v174
  %853 = vmatprep.subr.mxu0 %v177
  %854 = vmatpush1.msra.mxu0 %v176
  %855 = vmatprep.subr.mxu0 %v179
  %856 = vmatpush1.msra.mxu0 %v178
  %857 = vmatprep.subr.mxu0 %v181
  %858 = vmatpush1.msra.mxu0 %v180
  %859 = vmatprep.subr.mxu0 %v183
  %860 = vmatpush1.msra.mxu0 %v182
  %861 = vmatprep.subr.mxu0 %v185
  %862 = vmatpush1.msra.mxu0 %v184
  %863 = vmatprep.subr.mxu0 0.0
  %864 = vmatpush1.msra.mxu0 0.0
  %865 = vmatprep.subr.mxu0 0.0
  %866 = vmatpush1.msra.mxu0 0.0
  %867 = vmatprep.subr.mxu0 0.0
  %868 = vmatpush1.msra.mxu0 0.0
  %869 = vmatprep.subr.mxu0 0.0
  %870 = vmatpush1.msra.mxu0 0.0
  %871 = vmatprep.subr.mxu0 0.0
  %872 = vmatpush1.msra.mxu0 0.0
  %873 = vmatprep.subr.mxu0 0.0
  %874 = vmatpush1.msra.mxu0 0.0
  %875 = vmatprep.subr.mxu0 0.0
  %876 = vmatpush1.msra.mxu0 0.0
  %877 = vmatprep.subr.mxu0 0.0
  %878 = vmatpush1.msra.mxu0 0.0
  %879 = vmatprep.subr.mxu0 0.0
  %880 = vmatpush1.msra.mxu0 0.0
  %881 = vmatprep.subr.mxu0 0.0
  %882 = vmatpush1.msra.mxu0 0.0
  %883 = vmatprep.subr.mxu0 0.0
  %884 = vmatpush1.msra.mxu0 0.0
  %885 = vmatprep.subr.mxu0 0.0
  %886 = vmatpush1.msra.mxu0 0.0
  %887 = vmatprep.subr.mxu0 0.0
  %888 = vmatpush1.msra.mxu0 0.0
  %889 = vmatprep.subr.mxu0 0.0
  %890 = vmatpush1.msra.mxu0 0.0
  %891 = vmatprep.subr.mxu0 0.0
  %892 = vmatpush1.msra.mxu0 0.0
  %893 = vmatprep.subr.mxu0 0.0
  %894 = vmatpush1.msra.mxu0 0.0
  %895 = vmatprep.subr.mxu0 0.0
  %896 = vmatpush1.msra.mxu0 0.0
  %897 = vmatprep.subr.mxu0 0.0
  %898 = vmatpush1.msra.mxu0 0.0
  %899 = vmatprep.subr.mxu0 0.0
  %900 = vmatpush1.msra.mxu0 0.0
  %901 = vmatprep.subr.mxu0 0.0
  %902 = vmatpush1.msra.mxu0 0.0
  %903 = vmatprep.subr.mxu0 0.0
  %904 = vmatpush1.msra.mxu0 0.0
  %905 = vmatprep.subr.mxu0 0.0
  %906 = vmatpush1.msra.mxu0 0.0
  %907 = vmatprep.subr.mxu0 0.0
  %908 = vmatpush1.msra.mxu0 0.0
  %909 = vmatprep.subr.mxu0 0.0
  %910 = vmatpush1.msra.mxu0 0.0
  %911 = vmatprep.mubr.f32.mxu0 0.0
  %912 = vmatmul.mubr.f32.gmra.mrb[0].mxu0 %v845
  %v913 = vpop.f32.mrb[0].mxu0
  %v914 = vadd.f32 0.0, %v913
  %v915 = vpop.f32.mrb[0].mxu0
  %v916 = vadd.f32 0.0, %v915
  %917 = vdwg.mxu0
  %v918 = vld [vmem:[#allocation2 + $0x28] sm:$0xff]
  %v919 = vadd.f32 %v918, %v914
  %v920 = vxor.u32 %v919, 2147483648
  %v921 = vmul.f32 %v920, 1.442695
  %v922 = vpow.pop %v921
  %v923 = vadd.f32 %v922, 1.0
  %v924 = vrcp.pop %v923
  %v925 = vmul.f32 1.0, %v924
  %v926 = vmul.f32 %v925, 2.0
  %v927 = vsub.f32 %v926, 1.0
  %v928 = vmul.f32 %v925, %v802
  %930 = vrot.lane.b32.xlu0 %v927, 64
  %v931 = vpop.permute.xlu0 %930
  %v933 = vmul.f32 %v925, %v931
  %935 = vrot.lane.b32.xlu0 %v933, 32
  %v936 = vpop.permute.xlu0 %935
  %v938 = vadd.f32 %v928, %v936
  %v939 = vtanh.pop %v938
  %941 = vrot.lane.b32.xlu0 %v939, 64
  %v942 = vpop.permute.xlu0 %941
  %v944 = vmul.f32 %v925, %v942
  %v945 = vadd.f32 %v916, %v191
  %v946 = vxor.u32 %v945, 2147483648
  %v947 = vmul.f32 %v946, 1.442695
  %v948 = vpow.pop %v947
  %v949 = vadd.f32 %v948, 1.0
  %v950 = vrcp.pop %v949
  %v951 = vmul.f32 1.0, %v950
  %v952 = vmul.f32 %v951, 2.0
  %v953 = vsub.f32 %v952, 1.0
  %v954 = vmul.f32 %v951, %v828
  %956 = vrot.lane.b32.xlu0 %v953, 64
  %v957 = vpop.permute.xlu0 %956
  %v959 = vmul.f32 %v951, %v957
  %961 = vrot.lane.b32.xlu0 %v959, 32
  %v962 = vpop.permute.xlu0 %961
  %v964 = vadd.f32 %v954, %v962
  %v965 = vtanh.pop %v964
  %967 = vrot.lane.b32.xlu0 %v965, 64
  %v968 = vpop.permute.xlu0 %967
  %v970 = vmul.f32 %v951, %v968
  %972 = vrot.lane.b32.xlu0 %v944, 32
  %v973 = vpop.permute.xlu0 %972
  %976 = vrot.lane.b32.xlu0 %v970, 64
  %v977 = vpop.permute.xlu0 %976
  %v979 = vsel %vm298, %v973, %v977
  %v981 = vsel %vm193, %v979, 0
  %983 = vmatprep.subr.mxu0 %v171
  %984 = vmatpush1.msra.mxu0 %v170
  %985 = vmatprep.subr.mxu0 %v173
  %986 = vmatpush1.msra.mxu0 %v172
  %987 = vmatprep.subr.mxu0 %v175
  %988 = vmatpush1.msra.mxu0 %v174
  %989 = vmatprep.subr.mxu0 %v177
  %990 = vmatpush1.msra.mxu0 %v176
  %991 = vmatprep.subr.mxu0 %v179
  %992 = vmatpush1.msra.mxu0 %v178
  %993 = vmatprep.subr.mxu0 %v181
  %994 = vmatpush1.msra.mxu0 %v180
  %995 = vmatprep.subr.mxu0 %v183
  %996 = vmatpush1.msra.mxu0 %v182
  %997 = vmatprep.subr.mxu0 %v185
  %998 = vmatpush1.msra.mxu0 %v184
  %999 = vmatprep.subr.mxu0 0.0
  %1000 = vmatpush1.msra.mxu0 0.0
  %1001 = vmatprep.subr.mxu0 0.0
  %1002 = vmatpush1.msra.mxu0 0.0
  %1003 = vmatprep.subr.mxu0 0.0
  %1004 = vmatpush1.msra.mxu0 0.0
  %1005 = vmatprep.subr.mxu0 0.0
  %1006 = vmatpush1.msra.mxu0 0.0
  %1007 = vmatprep.subr.mxu0 0.0
  %1008 = vmatpush1.msra.mxu0 0.0
  %1009 = vmatprep.subr.mxu0 0.0
  %1010 = vmatpush1.msra.mxu0 0.0
  %1011 = vmatprep.subr.mxu0 0.0
  %1012 = vmatpush1.msra.mxu0 0.0
  %1013 = vmatprep.subr.mxu0 0.0
  %1014 = vmatpush1.msra.mxu0 0.0
  %1015 = vmatprep.subr.mxu0 0.0
  %1016 = vmatpush1.msra.mxu0 0.0
  %1017 = vmatprep.subr.mxu0 0.0
  %1018 = vmatpush1.msra.mxu0 0.0
  %1019 = vmatprep.subr.mxu0 0.0
  %1020 = vmatpush1.msra.mxu0 0.0
  %1021 = vmatprep.subr.mxu0 0.0
  %1022 = vmatpush1.msra.mxu0 0.0
  %1023 = vmatprep.subr.mxu0 0.0
  %1024 = vmatpush1.msra.mxu0 0.0
  %1025 = vmatprep.subr.mxu0 0.0
  %1026 = vmatpush1.msra.mxu0 0.0
  %1027 = vmatprep.subr.mxu0 0.0
  %1028 = vmatpush1.msra.mxu0 0.0
  %1029 = vmatprep.subr.mxu0 0.0
  %1030 = vmatpush1.msra.mxu0 0.0
  %1031 = vmatprep.subr.mxu0 0.0
  %1032 = vmatpush1.msra.mxu0 0.0
  %1033 = vmatprep.subr.mxu0 0.0
  %1034 = vmatpush1.msra.mxu0 0.0
  %1035 = vmatprep.subr.mxu0 0.0
  %1036 = vmatpush1.msra.mxu0 0.0
  %1037 = vmatprep.subr.mxu0 0.0
  %1038 = vmatpush1.msra.mxu0 0.0
  %1039 = vmatprep.subr.mxu0 0.0
  %1040 = vmatpush1.msra.mxu0 0.0
  %1041 = vmatprep.subr.mxu0 0.0
  %1042 = vmatpush1.msra.mxu0 0.0
  %1043 = vmatprep.subr.mxu0 0.0
  %1044 = vmatpush1.msra.mxu0 0.0
  %1045 = vmatprep.subr.mxu0 0.0
  %1046 = vmatpush1.msra.mxu0 0.0
  %1047 = vmatprep.mubr.f32.mxu0 0.0
  %1048 = vmatmul.mubr.f32.gmra.mrb[0].mxu0 %v981
  %v1049 = vpop.f32.mrb[0].mxu0
  %v1050 = vadd.f32 0.0, %v1049
  %v1051 = vpop.f32.mrb[0].mxu0
  %v1052 = vadd.f32 0.0, %v1051
  %1053 = vdwg.mxu0
  %v1054 = vld [vmem:[#allocation2 + $0x30] sm:$0xff]
  %v1055 = vadd.f32 %v1054, %v1050
  %v1056 = vxor.u32 %v1055, 2147483648
  %v1057 = vmul.f32 %v1056, 1.442695
  %v1058 = vpow.pop %v1057
  %v1059 = vadd.f32 %v1058, 1.0
  %v1060 = vrcp.pop %v1059
  %v1061 = vmul.f32 1.0, %v1060
  %v1062 = vmul.f32 %v1061, 2.0
  %v1063 = vsub.f32 %v1062, 1.0
  %v1064 = vmul.f32 %v1061, %v938
  %1066 = vrot.lane.b32.xlu0 %v1063, 64
  %v1067 = vpop.permute.xlu0 %1066
  %v1069 = vmul.f32 %v1061, %v1067
  %1071 = vrot.lane.b32.xlu0 %v1069, 32
  %v1072 = vpop.permute.xlu0 %1071
  %v1074 = vadd.f32 %v1064, %v1072
  %v1075 = vtanh.pop %v1074
  %1077 = vrot.lane.b32.xlu0 %v1075, 64
  %v1078 = vpop.permute.xlu0 %1077
  %v1080 = vmul.f32 %v1061, %v1078
  %v1081 = vadd.f32 %v1052, %v191
  %v1082 = vxor.u32 %v1081, 2147483648
  %v1083 = vmul.f32 %v1082, 1.442695
  %v1084 = vpow.pop %v1083
  %v1085 = vadd.f32 %v1084, 1.0
  %v1086 = vrcp.pop %v1085
  %v1087 = vmul.f32 1.0, %v1086
  %v1088 = vmul.f32 %v1087, 2.0
  %v1089 = vsub.f32 %v1088, 1.0
  %v1090 = vmul.f32 %v1087, %v964
  %1092 = vrot.lane.b32.xlu0 %v1089, 64
  %v1093 = vpop.permute.xlu0 %1092
  %v1095 = vmul.f32 %v1087, %v1093
  %1097 = vrot.lane.b32.xlu0 %v1095, 32
  %v1098 = vpop.permute.xlu0 %1097
  %v1100 = vadd.f32 %v1090, %v1098
  %v1101 = vtanh.pop %v1100
  %1103 = vrot.lane.b32.xlu0 %v1101, 64
  %v1104 = vpop.permute.xlu0 %1103
  %v1106 = vmul.f32 %v1087, %v1104
  %1108 = vrot.lane.b32.xlu0 %v1080, 32
  %v1109 = vpop.permute.xlu0 %1108
  %1112 = vrot.lane.b32.xlu0 %v1106, 64
  %v1113 = vpop.permute.xlu0 %1112
  %v1115 = vsel %vm298, %v1109, %v1113
  %v1117 = vsel %vm193, %v1115, 0
  %1119 = vmatprep.subr.mxu0 %v171
  %1120 = vmatpush1.msra.mxu0 %v170
  %1121 = vmatprep.subr.mxu0 %v173
  %1122 = vmatpush1.msra.mxu0 %v172
  %1123 = vmatprep.subr.mxu0 %v175
  %1124 = vmatpush1.msra.mxu0 %v174
  %1125 = vmatprep.subr.mxu0 %v177
  %1126 = vmatpush1.msra.mxu0 %v176
  %1127 = vmatprep.subr.mxu0 %v179
  %1128 = vmatpush1.msra.mxu0 %v178
  %1129 = vmatprep.subr.mxu0 %v181
  %1130 = vmatpush1.msra.mxu0 %v180
  %1131 = vmatprep.subr.mxu0 %v183
  %1132 = vmatpush1.msra.mxu0 %v182
  %1133 = vmatprep.subr.mxu0 %v185
  %1134 = vmatpush1.msra.mxu0 %v184
  %1135 = vmatprep.subr.mxu0 0.0
  %1136 = vmatpush1.msra.mxu0 0.0
  %1137 = vmatprep.subr.mxu0 0.0
  %1138 = vmatpush1.msra.mxu0 0.0
  %1139 = vmatprep.subr.mxu0 0.0
  %1140 = vmatpush1.msra.mxu0 0.0
  %1141 = vmatprep.subr.mxu0 0.0
  %1142 = vmatpush1.msra.mxu0 0.0
  %1143 = vmatprep.subr.mxu0 0.0
  %1144 = vmatpush1.msra.mxu0 0.0
  %1145 = vmatprep.subr.mxu0 0.0
  %1146 = vmatpush1.msra.mxu0 0.0
  %1147 = vmatprep.subr.mxu0 0.0
  %1148 = vmatpush1.msra.mxu0 0.0
  %1149 = vmatprep.subr.mxu0 0.0
  %1150 = vmatpush1.msra.mxu0 0.0
  %1151 = vmatprep.subr.mxu0 0.0
  %1152 = vmatpush1.msra.mxu0 0.0
  %1153 = vmatprep.subr.mxu0 0.0
  %1154 = vmatpush1.msra.mxu0 0.0
  %1155 = vmatprep.subr.mxu0 0.0
  %1156 = vmatpush1.msra.mxu0 0.0
  %1157 = vmatprep.subr.mxu0 0.0
  %1158 = vmatpush1.msra.mxu0 0.0
  %1159 = vmatprep.subr.mxu0 0.0
  %1160 = vmatpush1.msra.mxu0 0.0
  %1161 = vmatprep.subr.mxu0 0.0
  %1162 = vmatpush1.msra.mxu0 0.0
  %1163 = vmatprep.subr.mxu0 0.0
  %1164 = vmatpush1.msra.mxu0 0.0
  %1165 = vmatprep.subr.mxu0 0.0
  %1166 = vmatpush1.msra.mxu0 0.0
  %1167 = vmatprep.subr.mxu0 0.0
  %1168 = vmatpush1.msra.mxu0 0.0
  %1169 = vmatprep.subr.mxu0 0.0
  %1170 = vmatpush1.msra.mxu0 0.0
  %1171 = vmatprep.subr.mxu0 0.0
  %1172 = vmatpush1.msra.mxu0 0.0
  %1173 = vmatprep.subr.mxu0 0.0
  %1174 = vmatpush1.msra.mxu0 0.0
  %1175 = vmatprep.subr.mxu0 0.0
  %1176 = vmatpush1.msra.mxu0 0.0
  %1177 = vmatprep.subr.mxu0 0.0
  %1178 = vmatpush1.msra.mxu0 0.0
  %1179 = vmatprep.subr.mxu0 0.0
  %1180 = vmatpush1.msra.mxu0 0.0
  %1181 = vmatprep.subr.mxu0 0.0
  %1182 = vmatpush1.msra.mxu0 0.0
  %1183 = vmatprep.mubr.f32.mxu0 0.0
  %1184 = vmatmul.mubr.f32.gmra.mrb[0].mxu0 %v1117
  %v1185 = vpop.f32.mrb[0].mxu0
  %v1186 = vadd.f32 0.0, %v1185
  %v1187 = vpop.f32.mrb[0].mxu0
  %v1188 = vadd.f32 0.0, %v1187
  %1189 = vdwg.mxu0
  %v1190 = vld [vmem:[#allocation2 + $0x38] sm:$0xff]
  %v1191 = vadd.f32 %v1190, %v1186
  %v1192 = vxor.u32 %v1191, 2147483648
  %v1193 = vmul.f32 %v1192, 1.442695
  %v1194 = vpow.pop %v1193
  %v1195 = vadd.f32 %v1194, 1.0
  %v1196 = vrcp.pop %v1195
  %v1197 = vmul.f32 1.0, %v1196
  %v1198 = vmul.f32 %v1197, 2.0
  %v1199 = vsub.f32 %v1198, 1.0
  %v1200 = vmul.f32 %v1197, %v1074
  %1202 = vrot.lane.b32.xlu0 %v1199, 64
  %v1203 = vpop.permute.xlu0 %1202
  %v1205 = vmul.f32 %v1197, %v1203
  %1207 = vrot.lane.b32.xlu0 %v1205, 32
  %v1208 = vpop.permute.xlu0 %1207
  %v1210 = vadd.f32 %v1200, %v1208
  %v1211 = vtanh.pop %v1210
  %1213 = vrot.lane.b32.xlu0 %v1211, 64
  %v1214 = vpop.permute.xlu0 %1213
  %v1216 = vmul.f32 %v1197, %v1214
  %v1217 = vadd.f32 %v1188, %v191
  %v1218 = vxor.u32 %v1217, 2147483648
  %v1219 = vmul.f32 %v1218, 1.442695
  %v1220 = vpow.pop %v1219
  %v1221 = vadd.f32 %v1220, 1.0
  %v1222 = vrcp.pop %v1221
  %v1223 = vmul.f32 1.0, %v1222
  %v1224 = vmul.f32 %v1223, 2.0
  %v1225 = vsub.f32 %v1224, 1.0
  %v1226 = vmul.f32 %v1223, %v1100
  %1228 = vrot.lane.b32.xlu0 %v1225, 64
  %v1229 = vpop.permute.xlu0 %1228
  %v1231 = vmul.f32 %v1223, %v1229
  %1233 = vrot.lane.b32.xlu0 %v1231, 32
  %v1234 = vpop.permute.xlu0 %1233
  %v1236 = vadd.f32 %v1226, %v1234
  %v1237 = vtanh.pop %v1236
  %1239 = vrot.lane.b32.xlu0 %v1237, 64
  %v1240 = vpop.permute.xlu0 %1239
  %v1242 = vmul.f32 %v1223, %v1240
  %1244 = vrot.lane.b32.xlu0 %v1216, 32
  %v1245 = vpop.permute.xlu0 %1244
  %1248 = vrot.lane.b32.xlu0 %v1242, 64
  %v1249 = vpop.permute.xlu0 %1248
  %v1251 = vsel %vm298, %v1245, %v1249
  %v1253 = vsel %vm193, %v1251, 0
  %1255 = vmatprep.subr.mxu0 %v171
  %1256 = vmatpush1.msra.mxu0 %v170
  %1257 = vmatprep.subr.mxu0 %v173
  %1258 = vmatpush1.msra.mxu0 %v172
  %1259 = vmatprep.subr.mxu0 %v175
  %1260 = vmatpush1.msra.mxu0 %v174
  %1261 = vmatprep.subr.mxu0 %v177
  %1262 = vmatpush1.msra.mxu0 %v176
  %1263 = vmatprep.subr.mxu0 %v179
  %1264 = vmatpush1.msra.mxu0 %v178
  %1265 = vmatprep.subr.mxu0 %v181
  %1266 = vmatpush1.msra.mxu0 %v180
  %1267 = vmatprep.subr.mxu0 %v183
  %1268 = vmatpush1.msra.mxu0 %v182
  %1269 = vmatprep.subr.mxu0 %v185
  %1270 = vmatpush1.msra.mxu0 %v184
  %1271 = vmatprep.subr.mxu0 0.0
  %1272 = vmatpush1.msra.mxu0 0.0
  %1273 = vmatprep.subr.mxu0 0.0
  %1274 = vmatpush1.msra.mxu0 0.0
  %1275 = vmatprep.subr.mxu0 0.0
  %1276 = vmatpush1.msra.mxu0 0.0
  %1277 = vmatprep.subr.mxu0 0.0
  %1278 = vmatpush1.msra.mxu0 0.0
  %1279 = vmatprep.subr.mxu0 0.0
  %1280 = vmatpush1.msra.mxu0 0.0
  %1281 = vmatprep.subr.mxu0 0.0
  %1282 = vmatpush1.msra.mxu0 0.0
  %1283 = vmatprep.subr.mxu0 0.0
  %1284 = vmatpush1.msra.mxu0 0.0
  %1285 = vmatprep.subr.mxu0 0.0
  %1286 = vmatpush1.msra.mxu0 0.0
  %1287 = vmatprep.subr.mxu0 0.0
  %1288 = vmatpush1.msra.mxu0 0.0
  %1289 = vmatprep.subr.mxu0 0.0
  %1290 = vmatpush1.msra.mxu0 0.0
  %1291 = vmatprep.subr.mxu0 0.0
  %1292 = vmatpush1.msra.mxu0 0.0
  %1293 = vmatprep.subr.mxu0 0.0
  %1294 = vmatpush1.msra.mxu0 0.0
  %1295 = vmatprep.subr.mxu0 0.0
  %1296 = vmatpush1.msra.mxu0 0.0
  %1297 = vmatprep.subr.mxu0 0.0
  %1298 = vmatpush1.msra.mxu0 0.0
  %1299 = vmatprep.subr.mxu0 0.0
  %1300 = vmatpush1.msra.mxu0 0.0
  %1301 = vmatprep.subr.mxu0 0.0
  %1302 = vmatpush1.msra.mxu0 0.0
  %1303 = vmatprep.subr.mxu0 0.0
  %1304 = vmatpush1.msra.mxu0 0.0
  %1305 = vmatprep.subr.mxu0 0.0
  %1306 = vmatpush1.msra.mxu0 0.0
  %1307 = vmatprep.subr.mxu0 0.0
  %1308 = vmatpush1.msra.mxu0 0.0
  %1309 = vmatprep.subr.mxu0 0.0
  %1310 = vmatpush1.msra.mxu0 0.0
  %1311 = vmatprep.subr.mxu0 0.0
  %1312 = vmatpush1.msra.mxu0 0.0
  %1313 = vmatprep.subr.mxu0 0.0
  %1314 = vmatpush1.msra.mxu0 0.0
  %1315 = vmatprep.subr.mxu0 0.0
  %1316 = vmatpush1.msra.mxu0 0.0
  %1317 = vmatprep.subr.mxu0 0.0
  %1318 = vmatpush1.msra.mxu0 0.0
  %1319 = vmatprep.mubr.f32.mxu0 0.0
  %1320 = vmatmul.mubr.f32.gmra.mrb[0].mxu0 %v1253
  %v1321 = vpop.f32.mrb[0].mxu0
  %v1322 = vpop.f32.mrb[0].mxu0
  %v1323 = vadd.f32 0.0, %v1322
  %1324 = vdwg.mxu0
  %v1325 = vadd.f32 %v1323, %v191
  %v1326 = vxor.u32 %v1325, 2147483648
  %v1327 = vmul.f32 %v1326, 1.442695
  %v1328 = vpow.pop %v1327
  %v1329 = vadd.f32 %v1328, 1.0
  %v1330 = vrcp.pop %v1329
  %v1331 = vmul.f32 1.0, %v1330
  %v1332 = vmul.f32 %v1331, 2.0
  %v1333 = vsub.f32 %v1332, 1.0
  %v1334 = vmul.f32 %v1331, %v1236
  %1336 = vrot.lane.b32.xlu0 %v1333, 64
  %v1337 = vpop.permute.xlu0 %1336
  %v1339 = vmul.f32 %v1331, %v1337
  %1341 = vrot.lane.b32.xlu0 %v1339, 32
  %v1342 = vpop.permute.xlu0 %1341
  %v1344 = vadd.f32 %v1334, %v1342
  %v1345 = vtanh.pop %v1344
  %1347 = vrot.lane.b32.xlu0 %v1345, 64
  %v1348 = vpop.permute.xlu0 %1347
  %v1350 = vmul.f32 %v1331, %v1348
  %v1351 = vld [vmem:[%s4] sm:$0xff]
  %v1352 = vld [vmem:[%s4 + $0x8] sm:$0xff]
  %v1353 = vld [vmem:[%s4 + $0x10] sm:$0xff]
  %v1354 = vld [vmem:[%s4 + $0x18] sm:$0xff]
  %v1355 = vld [vmem:[%s5] sm:$0x1]
  %v1357 = vlaneseq
  %v1358 = vshrl.u32 %v1357, 7
  %v1359 = vsub.s32 0, %v1358
  %v1360 = vrot.slane %v1355, %v1359
  %1363 = vrot.lane.b32.xlu0 %v1350, 32
  %v1364 = vpop.permute.xlu0 %1363
  %v1365 = vsel %vm298, %v1364, 0
  %1367 = vmatprep.subr.mxu0 0.0
  %1368 = vmatpush1.msra.mxu0 %v1351
  %1369 = vmatprep.subr.mxu0 0.0
  %1370 = vmatpush1.msra.mxu0 %v1352
  %1371 = vmatprep.subr.mxu0 0.0
  %1372 = vmatpush1.msra.mxu0 %v1353
  %1373 = vmatprep.subr.mxu0 0.0
  %1374 = vmatpush1.msra.mxu0 %v1354
  %1375 = vmatprep.subr.mxu0 0.0
  %1376 = vmatpush1.msra.mxu0 0.0
  %1377 = vmatprep.subr.mxu0 0.0
  %1378 = vmatpush1.msra.mxu0 0.0
  %1379 = vmatprep.subr.mxu0 0.0
  %1380 = vmatpush1.msra.mxu0 0.0
  %1381 = vmatprep.subr.mxu0 0.0
  %1382 = vmatpush1.msra.mxu0 0.0
  %1383 = vmatprep.subr.mxu0 0.0
  %1384 = vmatpush1.msra.mxu0 0.0
  %1385 = vmatprep.subr.mxu0 0.0
  %1386 = vmatpush1.msra.mxu0 0.0
  %1387 = vmatprep.subr.mxu0 0.0
  %1388 = vmatpush1.msra.mxu0 0.0
  %1389 = vmatprep.subr.mxu0 0.0
  %1390 = vmatpush1.msra.mxu0 0.0
  %1391 = vmatprep.subr.mxu0 0.0
  %1392 = vmatpush1.msra.mxu0 0.0
  %1393 = vmatprep.subr.mxu0 0.0
  %1394 = vmatpush1.msra.mxu0 0.0
  %1395 = vmatprep.subr.mxu0 0.0
  %1396 = vmatpush1.msra.mxu0 0.0
  %1397 = vmatprep.subr.mxu0 0.0
  %1398 = vmatpush1.msra.mxu0 0.0
  %1399 = vmatprep.subr.mxu0 0.0
  %1400 = vmatpush1.msra.mxu0 0.0
  %1401 = vmatprep.subr.mxu0 0.0
  %1402 = vmatpush1.msra.mxu0 0.0
  %1403 = vmatprep.subr.mxu0 0.0
  %1404 = vmatpush1.msra.mxu0 0.0
  %1405 = vmatprep.subr.mxu0 0.0
  %1406 = vmatpush1.msra.mxu0 0.0
  %1407 = vmatprep.subr.mxu0 0.0
  %1408 = vmatpush1.msra.mxu0 0.0
  %1409 = vmatprep.subr.mxu0 0.0
  %1410 = vmatpush1.msra.mxu0 0.0
  %1411 = vmatprep.subr.mxu0 0.0
  %1412 = vmatpush1.msra.mxu0 0.0
  %1413 = vmatprep.subr.mxu0 0.0
  %1414 = vmatpush1.msra.mxu0 0.0
  %1415 = vmatprep.subr.mxu0 0.0
  %1416 = vmatpush1.msra.mxu0 0.0
  %1417 = vmatprep.subr.mxu0 0.0
  %1418 = vmatpush1.msra.mxu0 0.0
  %1419 = vmatprep.subr.mxu0 0.0
  %1420 = vmatpush1.msra.mxu0 0.0
  %1421 = vmatprep.subr.mxu0 0.0
  %1422 = vmatpush1.msra.mxu0 0.0
  %1423 = vmatprep.subr.mxu0 0.0
  %1424 = vmatpush1.msra.mxu0 0.0
  %1425 = vmatprep.subr.mxu0 0.0
  %1426 = vmatpush1.msra.mxu0 0.0
  %1427 = vmatprep.subr.mxu0 0.0
  %1428 = vmatpush1.msra.mxu0 0.0
  %1429 = vmatprep.subr.mxu0 0.0
  %1430 = vmatpush1.msra.mxu0 0.0
  %1431 = vmatprep.mubr.f32.mxu0 0.0
  %1432 = vmatmul.mubr.f32.gmra.mrb[0].mxu0 %v1365
  %v1433 = vpop.f32.mrb[0].mxu0
  %v1434 = vadd.f32 %v1360, %v1433
  %v1435 = vpop.f32.mrb[0].mxu0
  %1436 = vdwg.mxu0
  %1437 = vst [vmem:[%s6] sm:$0xff] %v1434
  // Predicated region
  $region26: #{lstm_forward.1} parent=0 // pred_check
    _
  $region27: #{lstm_forward.1} parent=0 // pred_check_branch
    %1439 = sbr.rel (0) target = $region29
  $region28: #{lstm_forward.1} parent=0 // pred_region
    _
  $region29: #{lstm_forward.1} parent=0 // pred_fallthru
    _
  // Predicated region
  $region30: #{lstm_forward.1} parent=0 // pred_check
    _
  $region31: #{lstm_forward.1} parent=0 // pred_check_branch
    %1441 = sbr.rel (0) target = $region33
  $region32: #{lstm_forward.1} parent=0 // pred_region
    _
  $region33: #{lstm_forward.1} parent=0 // pred_fallthru
    _

</llo_original>
